<compile_context>
chip_gen: v7x
topology: tpu7x:2x2x1
jax: 0.10.0
libtpu: 0.0.40
codegen_flags: <defaults>
</compile_context>

<pallas_src>
import jax
import jax.numpy as jnp
from jax.experimental import pallas as pl
from jax.experimental.pallas import tpu as pltpu


# ----------------------------------------------------------------------------
# Pallas kernels
# ----------------------------------------------------------------------------
def _conv_relu_pool_kernel(p_ref, w_ref, b_ref, o_ref):
    # p: (K, 4*Mp) im2col columns for ONE image; column order is
    #    (pool_corner, out_row, out_col).  w: (Cout, K); b: (Cout, 1).
    # o: (Cout, Mp) == maxpool2x2(relu(conv2d(x))) for that image.
    y = jnp.dot(w_ref[...], p_ref[...], preferred_element_type=jnp.float32)
    y = jnp.maximum(y + b_ref[...], 0.0)
    mp = o_ref.shape[1]
    o = jnp.maximum(
        jnp.maximum(y[:, 0 * mp:1 * mp], y[:, 1 * mp:2 * mp]),
        jnp.maximum(y[:, 2 * mp:3 * mp], y[:, 3 * mp:4 * mp]),
    )
    o_ref[...] = o.astype(o_ref.dtype)


def _mlp3_kernel(x_ref, w1_ref, b1_ref, w2_ref, b2_ref, w3_ref, b3_ref, o_ref):
    # Three chained (matmul + bias [+ ReLU]) layers, all resident in VMEM.
    h = jnp.dot(x_ref[...], w1_ref[...], preferred_element_type=jnp.float32)
    h = jnp.maximum(h + b1_ref[...], 0.0)
    h = jnp.dot(h, w2_ref[...], preferred_element_type=jnp.float32)
    h = jnp.maximum(h + b2_ref[...], 0.0)
    h = jnp.dot(h, w3_ref[...], preferred_element_type=jnp.float32)
    o_ref[...] = (h + b3_ref[...]).astype(o_ref.dtype)


# ----------------------------------------------------------------------------
# Fused conv + bias + ReLU + 2x2 max-pool (stride-1 conv, no padding, NCHW)
# ----------------------------------------------------------------------------
def _build_pool_patches(x, kh, kw):
    """im2col columns grouped by 2x2-pool corner.

    Returns (B, K, 4*PH*PW) with K = Cin*kh*kw (row order ci*kh*kw + di*kw + dj,
    matching w.reshape(Cout, -1)) and column index = corner*PH*PW + ph*PW + pw,
    corner = pi*2 + pj.  Value = x[b, ci, 2*ph + pi + di, 2*pw + pj + dj].
    """
    B, Cin, H, W = x.shape
    OH, OW = H - kh + 1, W - kw + 1
    PH, PW = OH // 2, OW // 2
    corners = []
    for pi in range(2):
        for pj in range(2):
            taps = []
            for di in range(kh):
                for dj in range(kw):
                    taps.append(
                        x[:, :,
                          pi + di:pi + di + 2 * PH:2,
                          pj + dj:pj + dj + 2 * PW:2])        # (B, Cin, PH, PW)
            t = jnp.stack(taps, axis=2)                        # (B, Cin, kh*kw, PH, PW)
            corners.append(t.reshape(B, Cin * kh * kw, PH * PW))
    return jnp.concatenate(corners, axis=2)                    # (B, K, 4*PH*PW)


def conv_relu_pool(x, wmat, bcol, kh=5, kw=5):
    """Fused nn.Conv2d(k=5, stride=1) + ReLU + nn.MaxPool2d(2, 2) on NCHW input."""
    B, Cin, H, W = x.shape
    Cout, K = wmat.shape
    assert K == Cin * kh * kw, (K, Cin, kh, kw)
    OH, OW = H - kh + 1, W - kw + 1
    PH, PW = OH // 2, OW // 2
    Mp = PH * PW

    # TODO(synk): the im2col window extraction (strided 5x5-tap gather) stays
    # as jit-fused XLA wrapper glue; BlockSpec DMA only expresses rectangular
    # tiles.  Matmul + bias + ReLU + pool all run inside the Pallas kernel.
    patches = _build_pool_patches(x, kh, kw)                   # (B, K, 4*Mp)

    out = pl.pallas_call(
        _conv_relu_pool_kernel,
        out_shape=jax.ShapeDtypeStruct((B, Cout, Mp), x.dtype),
        grid=(B,),
        in_specs=[
            pl.BlockSpec((None, K, 4 * Mp), lambda b: (b, 0, 0)),
            pl.BlockSpec((Cout, K), lambda b: (0, 0)),
            pl.BlockSpec((Cout, 1), lambda b: (0, 0)),
        ],
        out_specs=pl.BlockSpec((None, Cout, Mp), lambda b: (b, 0, 0)),
        compiler_params=pltpu.CompilerParams(
            dimension_semantics=("parallel",)),  # v7x: one image per TensorCore
    )(patches, wmat, bcol)
    return out.reshape(B, Cout, PH, PW)                        # NCHW


# ----------------------------------------------------------------------------
# Fused 3-layer MLP head
# ----------------------------------------------------------------------------
def mlp3(x, w1, b1, w2, b2, w3, b3):
    B = x.shape[0]
    N = w3.shape[1]
    return pl.pallas_call(
        _mlp3_kernel,
        out_shape=jax.ShapeDtypeStruct((B, N), x.dtype),
    )(x, w1, b1, w2, b2, w3, b3)


# ----------------------------------------------------------------------------
# LeNet forward (matches the PyTorch module, incl. shape_dict)
# ----------------------------------------------------------------------------
@jax.jit
def _lenet_apply(p, x):
    h1 = conv_relu_pool(x, p["w1m"], p["b1c"])                 # (B, 6, 14, 14)
    h2 = conv_relu_pool(h1, p["w2m"], p["b2c"])                # (B, 16, 5, 5)
    flat = h2.reshape(h2.shape[0], -1)                         # NCHW flatten, as .view
    logits = mlp3(flat, p["wo1t"], p["bo1r"], p["wo2t"], p["bo2r"],
                  p["wo3t"], p["bo3r"])                        # (B, 100)
    return logits, h1, h2, flat


def lenet_forward(prepped, x):
    logits, h1, h2, flat = _lenet_apply(prepped, x)
    B = flat.shape[0]
    shape_dict = {
        1: list(h1.shape),
        2: list(h2.shape),
        3: list(flat.shape),
        4: [B, prepped["wo1t"].shape[1]],
        5: [B, prepped["wo2t"].shape[1]],
        6: list(logits.shape),
    }
    return logits, shape_dict


# ----------------------------------------------------------------------------
# Parameters
# ----------------------------------------------------------------------------
def init_params(key):
    """PyTorch-layout params, deterministic U(-1/sqrt(fan_in), +...) init."""
    ks = jax.random.split(key, 10)

    def u(k, shape, fan_in):
        bound = 1.0 / float(fan_in) ** 0.5
        return jax.random.uniform(k, shape, jnp.float32, -bound, bound)

    return {
        "w1": u(ks[0], (6, 3, 5, 5), 3 * 25),
        "b1": u(ks[1], (6,), 3 * 25),
        "w2": u(ks[2], (16, 6, 5, 5), 6 * 25),
        "b2": u(ks[3], (16,), 6 * 25),
        "wo1": u(ks[4], (256, 400), 400),   # PyTorch Linear: (out, in)
        "bo1": u(ks[5], (256,), 400),
        "wo2": u(ks[6], (128, 256), 256),
        "bo2": u(ks[7], (128,), 256),
        "wo3": u(ks[8], (100, 128), 128),
        "bo3": u(ks[9], (100,), 128),
    }


def prepare_params(params):
    """One-time layout prep, hoisted out of the forward pass:
    conv weights as (Cout, Cin*kh*kw) matmul matrices, biases as columns/rows,
    FC weights pre-transposed to (in, out)."""
    return {
        "w1m": params["w1"].reshape(params["w1"].shape[0], -1),   # (6, 75)
        "b1c": params["b1"].reshape(-1, 1),                       # (6, 1)
        "w2m": params["w2"].reshape(params["w2"].shape[0], -1),   # (16, 150)
        "b2c": params["b2"].reshape(-1, 1),                       # (16, 1)
        "wo1t": params["wo1"].T, "bo1r": params["bo1"].reshape(1, -1),
        "wo2t": params["wo2"].T, "bo2r": params["bo2"].reshape(1, -1),
        "wo3t": params["wo3"].T, "bo3r": params["bo3"].reshape(1, -1),
    }


if __name__ == "__main__":
    key = jax.random.PRNGKey(0)
    pkey, xkey = jax.random.split(key)
    params = init_params(pkey)
    prepped = prepare_params(params)

    # Forward requires 32x32 spatial input (16*5*5 flatten); small batch=2.
    x = jax.random.normal(xkey, (2, 3, 32, 32), jnp.float32)

    logits, shape_dict = lenet_forward(prepped, x)
    logits = jax.block_until_ready(logits)

    assert logits.shape == (2, 100), logits.shape
    assert shape_dict == {
        1: [2, 6, 14, 14],
        2: [2, 16, 5, 5],
        3: [2, 400],
        4: [2, 256],
        5: [2, 128],
        6: [2, 100],
    }, shape_dict
    assert bool(jnp.all(jnp.isfinite(logits)))
    print("KERNEL_OK")
</pallas_src>

<mosaic_0001>
module attributes {stable_mosaic.version = 11 : i64} {
  func.func @_conv_relu_pool_kernel(%arg0: i32, %arg1: memref<1x75x784xf32, #tpu.memory_space<vmem>>, %arg2: memref<6x75xf32, #tpu.memory_space<vmem>>, %arg3: memref<6x1xf32, #tpu.memory_space<vmem>>, %arg4: memref<1x6x196xf32, #tpu.memory_space<vmem>>) attributes {dimension_semantics = [#tpu.dimension_semantics<parallel>], iteration_bounds = array<i64: 2>, scalar_prefetch = 0 : i64, scratch_operands = 0 : i64, tpu.core_type = #tpu.core_type<tc>, window_params = [{transform_indices = @transform_0, window_bounds = array<i64: 1, 75, 784>}, {pipeline_mode = #tpu.pipeline_mode<synchronous>, transform_indices = @transform_1, window_bounds = array<i64: 6, 75>}, {pipeline_mode = #tpu.pipeline_mode<synchronous>, transform_indices = @transform_2, window_bounds = array<i64: 6, 1>}, {transform_indices = @transform_3, window_bounds = array<i64: 1, 6, 196>}]} {
    %c0 = arith.constant 0 : index
    %c0_0 = arith.constant 0 : index
    %0 = vector.load %arg2[%c0, %c0_0] : memref<6x75xf32, #tpu.memory_space<vmem>>, vector<6x75xf32>
    %c0_1 = arith.constant 0 : index
    %c0_2 = arith.constant 0 : index
    %c0_3 = arith.constant 0 : index
    %1 = vector.load %arg1[%c0_1, %c0_2, %c0_3] : memref<1x75x784xf32, #tpu.memory_space<vmem>>, vector<1x75x784xf32>
    %2 = vector.shape_cast %1 : vector<1x75x784xf32> to vector<75x784xf32>
    %cst = arith.constant dense<0.000000e+00> : vector<6x784xf32>
    %3 = tpu.matmul %0, %2, %cst {dimension_numbers = #tpu.dot_dimension_numbers<[1], [0], [0], [1], [0, 0, 1, 1], [], []>} : vector<6x75xf32>, vector<75x784xf32>, vector<6x784xf32> -> vector<6x784xf32>
    %c0_4 = arith.constant 0 : index
    %c0_5 = arith.constant 0 : index
    %4 = vector.load %arg3[%c0_4, %c0_5] : memref<6x1xf32, #tpu.memory_space<vmem>>, vector<6x1xf32>
    %5 = vector.broadcast %4 : vector<6x1xf32> to vector<6x784xf32>
    %6 = arith.addf %3, %5 : vector<6x784xf32>
    %cst_6 = arith.constant 0.000000e+00 : f32
    %7 = vector.broadcast %cst_6 : f32 to vector<6x784xf32>
    %8 = arith.maximumf %6, %7 : vector<6x784xf32>
    %9 = vector.extract_strided_slice %8 {offsets = [0, 0], sizes = [6, 196], strides = [1, 1]} : vector<6x784xf32> to vector<6x196xf32>
    %10 = vector.extract_strided_slice %8 {offsets = [0, 196], sizes = [6, 196], strides = [1, 1]} : vector<6x784xf32> to vector<6x196xf32>
    %11 = arith.maximumf %9, %10 : vector<6x196xf32>
    %12 = vector.extract_strided_slice %8 {offsets = [0, 392], sizes = [6, 196], strides = [1, 1]} : vector<6x784xf32> to vector<6x196xf32>
    %13 = vector.extract_strided_slice %8 {offsets = [0, 588], sizes = [6, 196], strides = [1, 1]} : vector<6x784xf32> to vector<6x196xf32>
    %14 = arith.maximumf %12, %13 : vector<6x196xf32>
    %15 = arith.maximumf %11, %14 : vector<6x196xf32>
    %c0_7 = arith.constant 0 : index
    %c0_8 = arith.constant 0 : index
    %c0_9 = arith.constant 0 : index
    %16 = vector.load %arg4[%c0_7, %c0_8, %c0_9] : memref<1x6x196xf32, #tpu.memory_space<vmem>>, vector<1x6x196xf32>
    %17 = vector.shape_cast %16 : vector<1x6x196xf32> to vector<6x196xf32>
    %18 = vector.shape_cast %15 : vector<6x196xf32> to vector<1x6x196xf32>
    tpu.vector_store %arg4[%c0_7, %c0_8, %c0_9], %18 {strides = array<i32>} : memref<1x6x196xf32, #tpu.memory_space<vmem>>, vector<1x6x196xf32>,
    return
  }
  func.func @transform_0(%arg0: i32) -> (i32, i32, i32) {
    %c0_i32 = arith.constant 0 : i32
    %c0_i32_0 = arith.constant 0 : i32
    %c0_i32_1 = arith.constant 0 : i32
    return %arg0, %c0_i32, %c0_i32_0 : i32, i32, i32
  }
  func.func @transform_1(%arg0: i32) -> (i32, i32) {
    %c0_i32 = arith.constant 0 : i32
    %c0_i32_0 = arith.constant 0 : i32
    %c0_i32_1 = arith.constant 0 : i32
    return %c0_i32, %c0_i32_0 : i32, i32
  }
  func.func @transform_2(%arg0: i32) -> (i32, i32) {
    %c0_i32 = arith.constant 0 : i32
    %c0_i32_0 = arith.constant 0 : i32
    %c0_i32_1 = arith.constant 0 : i32
    return %c0_i32, %c0_i32_0 : i32, i32
  }
  func.func @transform_3(%arg0: i32) -> (i32, i32, i32) {
    %c0_i32 = arith.constant 0 : i32
    %c0_i32_0 = arith.constant 0 : i32
    %c0_i32_1 = arith.constant 0 : i32
    return %arg0, %c0_i32, %c0_i32_0 : i32, i32, i32
  }
}

module attributes {stable_mosaic.version = 11 : i64} {
  func.func @_conv_relu_pool_kernel(%arg0: i32, %arg1: memref<1x150x100xf32, #tpu.memory_space<vmem>>, %arg2: memref<16x150xf32, #tpu.memory_space<vmem>>, %arg3: memref<16x1xf32, #tpu.memory_space<vmem>>, %arg4: memref<1x16x25xf32, #tpu.memory_space<vmem>>) attributes {dimension_semantics = [#tpu.dimension_semantics<parallel>], iteration_bounds = array<i64: 2>, scalar_prefetch = 0 : i64, scratch_operands = 0 : i64, tpu.core_type = #tpu.core_type<tc>, window_params = [{transform_indices = @transform_0, window_bounds = array<i64: 1, 150, 100>}, {pipeline_mode = #tpu.pipeline_mode<synchronous>, transform_indices = @transform_1, window_bounds = array<i64: 16, 150>}, {pipeline_mode = #tpu.pipeline_mode<synchronous>, transform_indices = @transform_2, window_bounds = array<i64: 16, 1>}, {transform_indices = @transform_3, window_bounds = array<i64: 1, 16, 25>}]} {
    %c0 = arith.constant 0 : index
    %c0_0 = arith.constant 0 : index
    %0 = vector.load %arg2[%c0, %c0_0] : memref<16x150xf32, #tpu.memory_space<vmem>>, vector<16x150xf32>
    %c0_1 = arith.constant 0 : index
    %c0_2 = arith.constant 0 : index
    %c0_3 = arith.constant 0 : index
    %1 = vector.load %arg1[%c0_1, %c0_2, %c0_3] : memref<1x150x100xf32, #tpu.memory_space<vmem>>, vector<1x150x100xf32>
    %2 = vector.shape_cast %1 : vector<1x150x100xf32> to vector<150x100xf32>
    %cst = arith.constant dense<0.000000e+00> : vector<16x100xf32>
    %3 = tpu.matmul %0, %2, %cst {dimension_numbers = #tpu.dot_dimension_numbers<[1], [0], [0], [1], [0, 0, 1, 1], [], []>} : vector<16x150xf32>, vector<150x100xf32>, vector<16x100xf32> -> vector<16x100xf32>
    %c0_4 = arith.constant 0 : index
    %c0_5 = arith.constant 0 : index
    %4 = vector.load %arg3[%c0_4, %c0_5] : memref<16x1xf32, #tpu.memory_space<vmem>>, vector<16x1xf32>
    %5 = vector.broadcast %4 : vector<16x1xf32> to vector<16x100xf32>
    %6 = arith.addf %3, %5 : vector<16x100xf32>
    %cst_6 = arith.constant 0.000000e+00 : f32
    %7 = vector.broadcast %cst_6 : f32 to vector<16x100xf32>
    %8 = arith.maximumf %6, %7 : vector<16x100xf32>
    %9 = vector.extract_strided_slice %8 {offsets = [0, 0], sizes = [16, 25], strides = [1, 1]} : vector<16x100xf32> to vector<16x25xf32>
    %10 = vector.extract_strided_slice %8 {offsets = [0, 25], sizes = [16, 25], strides = [1, 1]} : vector<16x100xf32> to vector<16x25xf32>
    %11 = arith.maximumf %9, %10 : vector<16x25xf32>
    %12 = vector.extract_strided_slice %8 {offsets = [0, 50], sizes = [16, 25], strides = [1, 1]} : vector<16x100xf32> to vector<16x25xf32>
    %13 = vector.extract_strided_slice %8 {offsets = [0, 75], sizes = [16, 25], strides = [1, 1]} : vector<16x100xf32> to vector<16x25xf32>
    %14 = arith.maximumf %12, %13 : vector<16x25xf32>
    %15 = arith.maximumf %11, %14 : vector<16x25xf32>
    %c0_7 = arith.constant 0 : index
    %c0_8 = arith.constant 0 : index
    %c0_9 = arith.constant 0 : index
    %16 = vector.load %arg4[%c0_7, %c0_8, %c0_9] : memref<1x16x25xf32, #tpu.memory_space<vmem>>, vector<1x16x25xf32>
    %17 = vector.shape_cast %16 : vector<1x16x25xf32> to vector<16x25xf32>
    %18 = vector.shape_cast %15 : vector<16x25xf32> to vector<1x16x25xf32>
    tpu.vector_store %arg4[%c0_7, %c0_8, %c0_9], %18 {strides = array<i32>} : memref<1x16x25xf32, #tpu.memory_space<vmem>>, vector<1x16x25xf32>,
    return
  }
  func.func @transform_0(%arg0: i32) -> (i32, i32, i32) {
    %c0_i32 = arith.constant 0 : i32
    %c0_i32_0 = arith.constant 0 : i32
    %c0_i32_1 = arith.constant 0 : i32
    return %arg0, %c0_i32, %c0_i32_0 : i32, i32, i32
  }
  func.func @transform_1(%arg0: i32) -> (i32, i32) {
    %c0_i32 = arith.constant 0 : i32
    %c0_i32_0 = arith.constant 0 : i32
    %c0_i32_1 = arith.constant 0 : i32
    return %c0_i32, %c0_i32_0 : i32, i32
  }
  func.func @transform_2(%arg0: i32) -> (i32, i32) {
    %c0_i32 = arith.constant 0 : i32
    %c0_i32_0 = arith.constant 0 : i32
    %c0_i32_1 = arith.constant 0 : i32
    return %c0_i32, %c0_i32_0 : i32, i32
  }
  func.func @transform_3(%arg0: i32) -> (i32, i32, i32) {
    %c0_i32 = arith.constant 0 : i32
    %c0_i32_0 = arith.constant 0 : i32
    %c0_i32_1 = arith.constant 0 : i32
    return %arg0, %c0_i32, %c0_i32_0 : i32, i32, i32
  }
}

module attributes {stable_mosaic.version = 11 : i64} {
  func.func @_mlp3_kernel(%arg0: memref<2x400xf32, #tpu.memory_space<vmem>>, %arg1: memref<400x256xf32, #tpu.memory_space<vmem>>, %arg2: memref<1x256xf32, #tpu.memory_space<vmem>>, %arg3: memref<256x128xf32, #tpu.memory_space<vmem>>, %arg4: memref<1x128xf32, #tpu.memory_space<vmem>>, %arg5: memref<128x100xf32, #tpu.memory_space<vmem>>, %arg6: memref<1x100xf32, #tpu.memory_space<vmem>>, %arg7: memref<2x100xf32, #tpu.memory_space<vmem>>) attributes {dimension_semantics = [], scalar_prefetch = 0 : i64, scratch_operands = 0 : i64, tpu.core_type = #tpu.core_type<tc>} {
    %c0 = arith.constant 0 : index
    %c0_0 = arith.constant 0 : index
    %0 = vector.load %arg0[%c0, %c0_0] : memref<2x400xf32, #tpu.memory_space<vmem>>, vector<2x400xf32>
    %c0_1 = arith.constant 0 : index
    %c0_2 = arith.constant 0 : index
    %1 = vector.load %arg1[%c0_1, %c0_2] : memref<400x256xf32, #tpu.memory_space<vmem>>, vector<400x256xf32>
    %cst = arith.constant dense<0.000000e+00> : vector<2x256xf32>
    %2 = tpu.matmul %0, %1, %cst {dimension_numbers = #tpu.dot_dimension_numbers<[1], [0], [0], [1], [0, 0, 1, 1], [], []>} : vector<2x400xf32>, vector<400x256xf32>, vector<2x256xf32> -> vector<2x256xf32>
    %c0_3 = arith.constant 0 : index
    %c0_4 = arith.constant 0 : index
    %3 = vector.load %arg2[%c0_3, %c0_4] : memref<1x256xf32, #tpu.memory_space<vmem>>, vector<1x256xf32>
    %4 = vector.broadcast %3 : vector<1x256xf32> to vector<2x256xf32>
    %5 = arith.addf %2, %4 : vector<2x256xf32>
    %cst_5 = arith.constant 0.000000e+00 : f32
    %6 = vector.broadcast %cst_5 : f32 to vector<2x256xf32>
    %7 = arith.maximumf %5, %6 : vector<2x256xf32>
    %c0_6 = arith.constant 0 : index
    %c0_7 = arith.constant 0 : index
    %8 = vector.load %arg3[%c0_6, %c0_7] : memref<256x128xf32, #tpu.memory_space<vmem>>, vector<256x128xf32>
    %cst_8 = arith.constant dense<0.000000e+00> : vector<2x128xf32>
    %9 = tpu.matmul %7, %8, %cst_8 {dimension_numbers = #tpu.dot_dimension_numbers<[1], [0], [0], [1], [0, 0, 1, 1], [], []>} : vector<2x256xf32>, vector<256x128xf32>, vector<2x128xf32> -> vector<2x128xf32>
    %c0_9 = arith.constant 0 : index
    %c0_10 = arith.constant 0 : index
    %10 = vector.load %arg4[%c0_9, %c0_10] : memref<1x128xf32, #tpu.memory_space<vmem>>, vector<1x128xf32>
    %11 = vector.broadcast %10 : vector<1x128xf32> to vector<2x128xf32>
    %12 = arith.addf %9, %11 : vector<2x128xf32>
    %cst_11 = arith.constant 0.000000e+00 : f32
    %13 = vector.broadcast %cst_11 : f32 to vector<2x128xf32>
    %14 = arith.maximumf %12, %13 : vector<2x128xf32>
    %c0_12 = arith.constant 0 : index
    %c0_13 = arith.constant 0 : index
    %15 = vector.load %arg5[%c0_12, %c0_13] : memref<128x100xf32, #tpu.memory_space<vmem>>, vector<128x100xf32>
    %cst_14 = arith.constant dense<0.000000e+00> : vector<2x100xf32>
    %16 = tpu.matmul %14, %15, %cst_14 {dimension_numbers = #tpu.dot_dimension_numbers<[1], [0], [0], [1], [0, 0, 1, 1], [], []>} : vector<2x128xf32>, vector<128x100xf32>, vector<2x100xf32> -> vector<2x100xf32>
    %c0_15 = arith.constant 0 : index
    %c0_16 = arith.constant 0 : index
    %17 = vector.load %arg6[%c0_15, %c0_16] : memref<1x100xf32, #tpu.memory_space<vmem>>, vector<1x100xf32>
    %18 = vector.broadcast %17 : vector<1x100xf32> to vector<2x100xf32>
    %19 = arith.addf %16, %18 : vector<2x100xf32>
    %c0_17 = arith.constant 0 : index
    %c0_18 = arith.constant 0 : index
    %20 = vector.load %arg7[%c0_17, %c0_18] : memref<2x100xf32, #tpu.memory_space<vmem>>, vector<2x100xf32>
    tpu.vector_store %arg7[%c0_17, %c0_18], %19 {strides = array<i32>} : memref<2x100xf32, #tpu.memory_space<vmem>>, vector<2x100xf32>,
    return
  }
}

</mosaic_0001>

<llo_original>
// kernel: _lenet_apply.3
$region0: #{_lenet_apply.3}
  #allocation0 [shape = 'u32[]', space=smem, size = 0x4, offset = 0x4, fixed_abs, tag = 'smem constant byte address 0x4 - core index']
  #allocation1 [shape = 'u32[144,128]{1,0:T(1,128)}', space=vmem, size = 0x12000, scoped, tag = 'internal scratch']
  %s0 = inlined_call_operand.vmem [shape: f32[2,75,784], index: 0, kind: input, shape index: {}]
  %s1 = inlined_call_operand.vmem [shape: f32[6,75], index: 1, kind: input, shape index: {}]
  %s2 = inlined_call_operand.vmem [shape: f32[6,1], index: 2, kind: input, shape index: {}]
  %s3 = inlined_call_operand.vmem [shape: f32[2,6,196], index: 3, kind: output, shape index: {}]
  %s4 = sld [smem:[#allocation0]]
  $region45: #{_lenet_apply.3} parent=0
    _
  %s6 = ssub.s32 1, %s4
  %s7 = scalar_select 0, %s6, %s4
  loop: start=0, step=1, limit=4
  $region2: #{_lenet_apply.3} parent=0 // loop_pre_header
    _
  $region3: #{_lenet_apply.3} parent=0 // loop_header
    %s9 = sphi 0, %s13
    %p10 = scmp.ge.s32.totalorder %s9, 4
    %s19 = sphi 0, %s21
    %s22 = sphi 0, %s19
    %s23 = sphi 0, %s22
    %s39 = sphi 0, %s23
    %s43 = sphi 0, %s43
    %s45 = sphi 0, %s43
    %s46 = sphi 0, %s45
    %s60 = sphi 0, %s46
    %s64 = sphi 0, %s64
    %s66 = sphi 0, %s64
    %s67 = sphi 0, %s66
    %s81 = sphi 0, %s67
    %s87 = sphi 0, %s89
    %s90 = sphi 0, %s87
    %s91 = sphi 0, %s90
    %s107 = sphi 0, %s91
  $region4: #{_lenet_apply.3} parent=0 // loop_header_branch
    %12 = sbr.rel (%p10) target = $region8
  $region5: #{_lenet_apply.3} parent=0 // loop_body
    %s14 = ssub.s32 %s9, 1
    %s15 = ssub.s32 %s9, 2
    %s16 = sadd.s32 %s9, 1
    %s17 = ssub.s32 %s9, %s16
    %p18 = scmp.eq.s32.totalorder %s17, 0
    %s20 = sadd.s32 %s19, 1
    %s21 = scalar_select %p18, %s19, %s20
    %p24 = pneg %p18
    %p25 = scmp.eq.s32.totalorder %s9, 1
    %p26 = por %p24, %p25
    %p27 = scmp.ne.s32.totalorder %s19, %s22
    %p28 = scmp.eq.s32.totalorder %s9, 0
    %p29 = por %p27, %p28
    %p30 = scmp.ne.s32.totalorder %s19, %s22
    %p31 = scmp.eq.s32.totalorder %s14, 1
    %p32 = por %p30, %p31
    %p33 = scmp.ne.s32.totalorder %s22, %s23
    %p34 = scmp.eq.s32.totalorder %s14, 0
    %p35 = por %p33, %p34
    %p36 = scmp.ne.s32.totalorder %s22, %s23
    %p37 = scmp.eq.s32.totalorder %s15, 1
    %p38 = por %p36, %p37
    %p40 = scmp.ne.s32.totalorder %s23, %s39
    %p41 = scmp.eq.s32.totalorder %s15, 0
    %p42 = por %p40, %p41
    %s44 = sadd.s32 %s43, 1
    %p47 = scmp.eq.s32.totalorder %s9, 1
    %p48 = scmp.ne.s32.totalorder %s43, %s45
    %p49 = scmp.eq.s32.totalorder %s9, 0
    %p50 = por %p48, %p49
    %p51 = scmp.ne.s32.totalorder %s43, %s45
    %p52 = scmp.eq.s32.totalorder %s14, 1
    %p53 = por %p51, %p52
    %p54 = scmp.ne.s32.totalorder %s45, %s46
    %p55 = scmp.eq.s32.totalorder %s14, 0
    %p56 = por %p54, %p55
    %p57 = scmp.ne.s32.totalorder %s45, %s46
    %p58 = scmp.eq.s32.totalorder %s15, 1
    %p59 = por %p57, %p58
    %p61 = scmp.ne.s32.totalorder %s46, %s60
    %p62 = scmp.eq.s32.totalorder %s15, 0
    %p63 = por %p61, %p62
    %s65 = sadd.s32 %s64, 1
    %p68 = scmp.eq.s32.totalorder %s9, 1
    %p69 = scmp.ne.s32.totalorder %s64, %s66
    %p70 = scmp.eq.s32.totalorder %s9, 0
    %p71 = por %p69, %p70
    %p72 = scmp.ne.s32.totalorder %s64, %s66
    %p73 = scmp.eq.s32.totalorder %s14, 1
    %p74 = por %p72, %p73
    %p75 = scmp.ne.s32.totalorder %s66, %s67
    %p76 = scmp.eq.s32.totalorder %s14, 0
    %p77 = por %p75, %p76
    %p78 = scmp.ne.s32.totalorder %s66, %s67
    %p79 = scmp.eq.s32.totalorder %s15, 1
    %p80 = por %p78, %p79
    %p82 = scmp.ne.s32.totalorder %s67, %s81
    %p83 = scmp.eq.s32.totalorder %s15, 0
    %p84 = por %p82, %p83
    %s85 = ssub.s32 %s9, %s16
    %p86 = scmp.eq.s32.totalorder %s85, 0
    %s88 = sadd.s32 %s87, 1
    %s89 = scalar_select %p86, %s87, %s88
    %p92 = pneg %p86
    %p93 = scmp.eq.s32.totalorder %s9, 1
    %p94 = por %p92, %p93
    %p95 = scmp.ne.s32.totalorder %s87, %s90
    %p96 = scmp.eq.s32.totalorder %s9, 0
    %p97 = por %p95, %p96
    %p98 = scmp.ne.s32.totalorder %s87, %s90
    %p99 = scmp.eq.s32.totalorder %s14, 1
    %p100 = por %p98, %p99
    %p101 = scmp.ne.s32.totalorder %s90, %s91
    %p102 = scmp.eq.s32.totalorder %s14, 0
    %p103 = por %p101, %p102
    %p104 = scmp.ne.s32.totalorder %s90, %s91
    %p105 = scmp.eq.s32.totalorder %s15, 1
    %p106 = por %p104, %p105
    %p108 = scmp.ne.s32.totalorder %s91, %s107
    %p109 = scmp.eq.s32.totalorder %s15, 0
    %p110 = por %p108, %p109
    %p111 = scmp.le.s32.totalorder 1, %s9
    %p112 = scmp.lt.s32.totalorder %s9, 3
    %p113 = pnand %p111, %p112
    %p114 = pneg %p113
    // Predicated region
    $region9: #{_lenet_apply.3} parent=5 // pred_check
      _
    $region10: #{_lenet_apply.3} parent=5 // pred_check_branch
      %116 = sbr.rel (%p113) target = $region12
    $region11: #{_lenet_apply.3} parent=5 // pred_region
      %s117 = ssub.s32 %s9, 1
      // Predicated region
      $region13: #{_lenet_apply.3} parent=11 // pred_check
        %p118 = pneg %p56
      $region14: #{_lenet_apply.3} parent=11 // pred_check_branch
        %120 = sbr.rel (%p118) target = $region16
      $region15: #{_lenet_apply.3} parent=11 // pred_region
        _
      $region16: #{_lenet_apply.3} parent=11 // pred_fallthru
        _
      // Predicated region
      $region17: #{_lenet_apply.3} parent=11 // pred_check
        %p121 = pneg %p77
      $region18: #{_lenet_apply.3} parent=11 // pred_check_branch
        %123 = sbr.rel (%p121) target = $region20
      $region19: #{_lenet_apply.3} parent=11 // pred_region
        _
      $region20: #{_lenet_apply.3} parent=11 // pred_fallthru
        _
    $region12: #{_lenet_apply.3} parent=5 // pred_fallthru
      _
    %p124 = scmp.lt.s32.totalorder %s9, 2
    // Predicated region
    $region21: #{_lenet_apply.3} parent=5 // pred_check
      %p125 = pneg %p124
    $region22: #{_lenet_apply.3} parent=5 // pred_check_branch
      %127 = sbr.rel (%p125) target = $region24
    $region23: #{_lenet_apply.3} parent=5 // pred_region
      // Predicated region
      $region25: #{_lenet_apply.3} parent=23 // pred_check
        %p128 = pneg %p29
      $region26: #{_lenet_apply.3} parent=23 // pred_check_branch
        %130 = sbr.rel (%p128) target = $region28
      $region27: #{_lenet_apply.3} parent=23 // pred_region
        %p131 = scmp.lt.s32.totalorder %s9, 1
        %s132 = scalar_select %p131, %s9, 1
        %s133 = smul.addr %s132, 70
        %s134 = smul.addr %s133, 8
        %s135 = scalar_lea.vmem %s0, %s134
      $region28: #{_lenet_apply.3} parent=23 // pred_fallthru
        _
    $region24: #{_lenet_apply.3} parent=5 // pred_fallthru
      _
    %p136 = scmp.le.s32.totalorder 1, %s9
    %p137 = scmp.lt.s32.totalorder %s9, 3
    %p138 = pnand %p136, %p137
    %p139 = pneg %p138
    // Predicated region
    $region29: #{_lenet_apply.3} parent=5 // pred_check
      _
    $region30: #{_lenet_apply.3} parent=5 // pred_check_branch
      %141 = sbr.rel (%p138) target = $region32
    $region31: #{_lenet_apply.3} parent=5 // pred_region
      %s142 = ssub.s32 %s9, 1
      %p143 = scmp.lt.s32.totalorder %s14, 1
      %s144 = scalar_select %p143, %s14, 1
      %s145 = smul.addr %s144, 70
      %s146 = smul.addr %s145, 8
      %s147 = scalar_lea.vmem %s0, %s146
      %p148 = pneg %p35
      %p149 = pneg %p32
      %p150 = pneg %p56
      %p151 = pneg %p53
      %p152 = pneg %p77
      %p153 = pneg %p74
      %p154 = pneg %p103
      %p155 = pneg %p100
      %p156 = scmp.lt.s32.totalorder %s14, 1
      %s157 = scalar_select %p156, %s14, 1
      %s158 = smul.addr %s157, 2
      %s159 = smul.addr %s158, 8
      %s160 = scalar_lea.vmem %s3, %s159
      %p161 = scmp.lt.s32.totalorder %s14, 1
      %s162 = scalar_select %p161, %s14, 1
      %s163 = smul.addr %s162, 70
      %s164 = smul.addr %s163, 8
      %s165 = scalar_lea.vmem %s0, %s164
      %p166 = scmp.lt.s32.totalorder %s14, 1
      %s167 = scalar_select %p166, %s14, 1
      %s168 = smul.addr %s167, 2
      %s169 = smul.addr %s168, 8
      %s170 = scalar_lea.vmem %s3, %s169
      %v171 = vld [vmem:[%s1] sm:$0x3f]
      %v172 = vld [vmem:[%s165] sm:$0xff]
      %v173 = vld [vmem:[%s165 + $0x8] sm:$0xff]
      %v174 = vld [vmem:[%s165 + $0x10] sm:$0xff]
      %v175 = vld [vmem:[%s165 + $0x18] sm:$0xff]
      %v176 = vld [vmem:[%s165 + $0x20] sm:$0xff]
      %v177 = vld [vmem:[%s165 + $0x28] sm:$0xff]
      %v178 = vld [vmem:[%s165 + $0x30] sm:$0xff]
      %v179 = vld [vmem:[%s165 + $0x38] sm:$0xff]
      %v180 = vld [vmem:[%s165 + $0x40] sm:$0xff]
      %v181 = vld [vmem:[%s165 + $0x48] sm:$0xff]
      %v182 = vld [vmem:[%s165 + $0x50] sm:$0xff]
      %v183 = vld [vmem:[%s165 + $0x58] sm:$0xff]
      %v184 = vld [vmem:[%s165 + $0x60] sm:$0xff]
      %v185 = vld [vmem:[%s165 + $0x68] sm:$0xff]
      %v186 = vld [vmem:[%s165 + $0x70] sm:$0xff]
      %v187 = vld [vmem:[%s165 + $0x78] sm:$0xff]
      %v188 = vld [vmem:[%s165 + $0x80] sm:$0xff]
      %v189 = vld [vmem:[%s165 + $0x88] sm:$0xff]
      %v190 = vld [vmem:[%s165 + $0x90] sm:$0xff]
      %v191 = vld [vmem:[%s165 + $0x98] sm:$0xff]
      %v192 = vld [vmem:[%s165 + $0xa0] sm:$0xff]
      %v193 = vld [vmem:[%s165 + $0xa8] sm:$0xff]
      %v194 = vld [vmem:[%s165 + $0xb0] sm:$0xff]
      %v195 = vld [vmem:[%s165 + $0xb8] sm:$0xff]
      %v196 = vld [vmem:[%s165 + $0xc0] sm:$0xff]
      %v197 = vld [vmem:[%s165 + $0xc8] sm:$0xff]
      %v198 = vld [vmem:[%s165 + $0xd0] sm:$0xff]
      %v199 = vld [vmem:[%s165 + $0xd8] sm:$0xff]
      %v200 = vld [vmem:[%s165 + $0xe0] sm:$0xff]
      %v201 = vld [vmem:[%s165 + $0xe8] sm:$0xff]
      %v202 = vld [vmem:[%s165 + $0xf0] sm:$0xff]
      %v203 = vld [vmem:[%s165 + $0xf8] sm:$0xff]
      %v204 = vld [vmem:[%s165 + $0x100] sm:$0xff]
      %v205 = vld [vmem:[%s165 + $0x108] sm:$0xff]
      %v206 = vld [vmem:[%s165 + $0x110] sm:$0xff]
      %v207 = vld [vmem:[%s165 + $0x118] sm:$0xff]
      %v208 = vld [vmem:[%s165 + $0x120] sm:$0xff]
      %v209 = vld [vmem:[%s165 + $0x128] sm:$0xff]
      %v210 = vld [vmem:[%s165 + $0x130] sm:$0xff]
      %v211 = vld [vmem:[%s165 + $0x138] sm:$0xff]
      %v212 = vld [vmem:[%s165 + $0x140] sm:$0xff]
      %v213 = vld [vmem:[%s165 + $0x148] sm:$0xff]
      %v214 = vld [vmem:[%s165 + $0x150] sm:$0xff]
      %v215 = vld [vmem:[%s165 + $0x158] sm:$0xff]
      %v216 = vld [vmem:[%s165 + $0x160] sm:$0xff]
      %v217 = vld [vmem:[%s165 + $0x168] sm:$0xff]
      %v218 = vld [vmem:[%s165 + $0x170] sm:$0xff]
      %v219 = vld [vmem:[%s165 + $0x178] sm:$0xff]
      %v220 = vld [vmem:[%s165 + $0x180] sm:$0xff]
      %v221 = vld [vmem:[%s165 + $0x188] sm:$0xff]
      %v222 = vld [vmem:[%s165 + $0x190] sm:$0xff]
      %v223 = vld [vmem:[%s165 + $0x198] sm:$0xff]
      %v224 = vld [vmem:[%s165 + $0x1a0] sm:$0xff]
      %v225 = vld [vmem:[%s165 + $0x1a8] sm:$0xff]
      %v226 = vld [vmem:[%s165 + $0x1b0] sm:$0xff]
      %v227 = vld [vmem:[%s165 + $0x1b8] sm:$0xff]
      %v228 = vld [vmem:[%s165 + $0x1c0] sm:$0xff]
      %v229 = vld [vmem:[%s165 + $0x1c8] sm:$0xff]
      %v230 = vld [vmem:[%s165 + $0x1d0] sm:$0xff]
      %v231 = vld [vmem:[%s165 + $0x1d8] sm:$0xff]
      %v232 = vld [vmem:[%s165 + $0x1e0] sm:$0xff]
      %v233 = vld [vmem:[%s165 + $0x1e8] sm:$0xff]
      %v234 = vld [vmem:[%s165 + $0x1f0] sm:$0xff]
      %v235 = vld [vmem:[%s165 + $0x1f8] sm:$0x7]
      %v236 = vld [vmem:[%s165 + $0x200] sm:$0x7]
      %v237 = vld [vmem:[%s165 + $0x208] sm:$0x7]
      %v238 = vld [vmem:[%s165 + $0x210] sm:$0x7]
      %v239 = vld [vmem:[%s165 + $0x218] sm:$0x7]
      %v240 = vld [vmem:[%s165 + $0x220] sm:$0x7]
      %v241 = vld [vmem:[%s165 + $0x228] sm:$0x7]
      %v242 = vld [vmem:[%s2] sm:$0x3f]
      %244 = vset.pattern.permute.xlu0 0
      %245 = vperm.xlu0 %244, %v242
      %v246 = vpop.permute.xlu0 %245
      %vm248 = vcmask 613376
      %v250 = vsel %vm248, %v171, 0
      %vm252 = vcmask 1042432
      %v254 = vsel %vm252, %v235, 0
      %v257 = vsel %vm252, %v236, 0
      %v260 = vsel %vm252, %v237, 0
      %v263 = vsel %vm252, %v238, 0
      %v266 = vsel %vm252, %v239, 0
      %v269 = vsel %vm252, %v240, 0
      %v272 = vsel %vm252, %v241, 0
      %274 = vmatprep.subr.mxu0 %v173
      %275 = vmatpush1.msra.mxu0 %v172
      %276 = vmatprep.subr.mxu0 %v180
      %277 = vmatpush1.msra.mxu0 %v179
      %278 = vmatprep.subr.mxu0 %v187
      %279 = vmatpush1.msra.mxu0 %v186
      %280 = vmatprep.subr.mxu0 %v194
      %281 = vmatpush1.msra.mxu0 %v193
      %282 = vmatprep.subr.mxu0 %v201
      %283 = vmatpush1.msra.mxu0 %v200
      %284 = vmatprep.subr.mxu0 %v208
      %285 = vmatpush1.msra.mxu0 %v207
      %286 = vmatprep.subr.mxu0 %v215
      %287 = vmatpush1.msra.mxu0 %v214
      %288 = vmatprep.subr.mxu0 %v222
      %289 = vmatpush1.msra.mxu0 %v221
      %290 = vmatprep.subr.mxu0 %v229
      %291 = vmatpush1.msra.mxu0 %v228
      %292 = vmatprep.subr.mxu0 %v257
      %293 = vmatpush1.msra.mxu0 %v254
      %294 = vmatprep.subr.mxu0 0.0
      %295 = vmatpush1.msra.mxu0 0.0
      %296 = vmatprep.subr.mxu0 0.0
      %297 = vmatpush1.msra.mxu0 0.0
      %298 = vmatprep.subr.mxu0 0.0
      %299 = vmatpush1.msra.mxu0 0.0
      %300 = vmatprep.subr.mxu0 0.0
      %301 = vmatpush1.msra.mxu0 0.0
      %302 = vmatprep.subr.mxu0 0.0
      %303 = vmatpush1.msra.mxu0 0.0
      %304 = vmatprep.subr.mxu0 0.0
      %305 = vmatpush1.msra.mxu0 0.0
      %306 = vmatprep.subr.mxu0 0.0
      %307 = vmatpush1.msra.mxu0 0.0
      %308 = vmatprep.subr.mxu0 0.0
      %309 = vmatpush1.msra.mxu0 0.0
      %310 = vmatprep.subr.mxu0 0.0
      %311 = vmatpush1.msra.mxu0 0.0
      %312 = vmatprep.subr.mxu0 0.0
      %313 = vmatpush1.msra.mxu0 0.0
      %314 = vmatprep.subr.mxu0 0.0
      %315 = vmatpush1.msra.mxu0 0.0
      %316 = vmatprep.subr.mxu0 0.0
      %317 = vmatpush1.msra.mxu0 0.0
      %318 = vmatprep.subr.mxu0 0.0
      %319 = vmatpush1.msra.mxu0 0.0
      %320 = vmatprep.subr.mxu0 0.0
      %321 = vmatpush1.msra.mxu0 0.0
      %322 = vmatprep.subr.mxu0 0.0
      %323 = vmatpush1.msra.mxu0 0.0
      %324 = vmatprep.subr.mxu0 0.0
      %325 = vmatpush1.msra.mxu0 0.0
      %326 = vmatprep.subr.mxu0 0.0
      %327 = vmatpush1.msra.mxu0 0.0
      %328 = vmatprep.subr.mxu0 0.0
      %329 = vmatpush1.msra.mxu0 0.0
      %330 = vmatprep.subr.mxu0 0.0
      %331 = vmatpush1.msra.mxu0 0.0
      %332 = vmatprep.subr.mxu0 0.0
      %333 = vmatpush1.msra.mxu0 0.0
      %334 = vmatprep.subr.mxu0 0.0
      %335 = vmatpush1.msra.mxu0 0.0
      %336 = vmatprep.subr.mxu0 0.0
      %337 = vmatpush1.msra.mxu0 0.0
      %338 = vmatprep.mubr.f32.mxu0 0.0
      %339 = vmatmul.mubr.f32.gmra.mrb[0].mxu0 %v250
      %v340 = vpop.f32.mrb[0].mxu0
      %v341 = vadd.f32 %v246, %v340
      %v342 = vpop.f32.mrb[0].mxu0
      %v343 = vadd.f32 %v246, %v342
      %344 = vdwg.mxu0
      %345 = vmatprep.subr.mxu0 %v175
      %346 = vmatpush1.msra.mxu0 %v174
      %347 = vmatprep.subr.mxu0 %v182
      %348 = vmatpush1.msra.mxu0 %v181
      %349 = vmatprep.subr.mxu0 %v189
      %350 = vmatpush1.msra.mxu0 %v188
      %351 = vmatprep.subr.mxu0 %v196
      %352 = vmatpush1.msra.mxu0 %v195
      %353 = vmatprep.subr.mxu0 %v203
      %354 = vmatpush1.msra.mxu0 %v202
      %355 = vmatprep.subr.mxu0 %v210
      %356 = vmatpush1.msra.mxu0 %v209
      %357 = vmatprep.subr.mxu0 %v217
      %358 = vmatpush1.msra.mxu0 %v216
      %359 = vmatprep.subr.mxu0 %v224
      %360 = vmatpush1.msra.mxu0 %v223
      %361 = vmatprep.subr.mxu0 %v231
      %362 = vmatpush1.msra.mxu0 %v230
      %363 = vmatprep.subr.mxu0 %v263
      %364 = vmatpush1.msra.mxu0 %v260
      %365 = vmatprep.subr.mxu0 0.0
      %366 = vmatpush1.msra.mxu0 0.0
      %367 = vmatprep.subr.mxu0 0.0
      %368 = vmatpush1.msra.mxu0 0.0
      %369 = vmatprep.subr.mxu0 0.0
      %370 = vmatpush1.msra.mxu0 0.0
      %371 = vmatprep.subr.mxu0 0.0
      %372 = vmatpush1.msra.mxu0 0.0
      %373 = vmatprep.subr.mxu0 0.0
      %374 = vmatpush1.msra.mxu0 0.0
      %375 = vmatprep.subr.mxu0 0.0
      %376 = vmatpush1.msra.mxu0 0.0
      %377 = vmatprep.subr.mxu0 0.0
      %378 = vmatpush1.msra.mxu0 0.0
      %379 = vmatprep.subr.mxu0 0.0
      %380 = vmatpush1.msra.mxu0 0.0
      %381 = vmatprep.subr.mxu0 0.0
      %382 = vmatpush1.msra.mxu0 0.0
      %383 = vmatprep.subr.mxu0 0.0
      %384 = vmatpush1.msra.mxu0 0.0
      %385 = vmatprep.subr.mxu0 0.0
      %386 = vmatpush1.msra.mxu0 0.0
      %387 = vmatprep.subr.mxu0 0.0
      %388 = vmatpush1.msra.mxu0 0.0
      %389 = vmatprep.subr.mxu0 0.0
      %390 = vmatpush1.msra.mxu0 0.0
      %391 = vmatprep.subr.mxu0 0.0
      %392 = vmatpush1.msra.mxu0 0.0
      %393 = vmatprep.subr.mxu0 0.0
      %394 = vmatpush1.msra.mxu0 0.0
      %395 = vmatprep.subr.mxu0 0.0
      %396 = vmatpush1.msra.mxu0 0.0
      %397 = vmatprep.subr.mxu0 0.0
      %398 = vmatpush1.msra.mxu0 0.0
      %399 = vmatprep.subr.mxu0 0.0
      %400 = vmatpush1.msra.mxu0 0.0
      %401 = vmatprep.subr.mxu0 0.0
      %402 = vmatpush1.msra.mxu0 0.0
      %403 = vmatprep.subr.mxu0 0.0
      %404 = vmatpush1.msra.mxu0 0.0
      %405 = vmatprep.subr.mxu0 0.0
      %406 = vmatpush1.msra.mxu0 0.0
      %407 = vmatprep.subr.mxu0 0.0
      %408 = vmatpush1.msra.mxu0 0.0
      %409 = vmatprep.mubr.f32.mxu0 0.0
      %410 = vmatmul.mubr.f32.gmra.mrb[0].mxu0 %v250
      %v411 = vpop.f32.mrb[0].mxu0
      %v412 = vadd.f32 %v246, %v411
      %v413 = vpop.f32.mrb[0].mxu0
      %v414 = vadd.f32 %v246, %v413
      %415 = vdwg.mxu0
      %416 = vmatprep.subr.mxu0 %v177
      %417 = vmatpush1.msra.mxu0 %v176
      %418 = vmatprep.subr.mxu0 %v184
      %419 = vmatpush1.msra.mxu0 %v183
      %420 = vmatprep.subr.mxu0 %v191
      %421 = vmatpush1.msra.mxu0 %v190
      %422 = vmatprep.subr.mxu0 %v198
      %423 = vmatpush1.msra.mxu0 %v197
      %424 = vmatprep.subr.mxu0 %v205
      %425 = vmatpush1.msra.mxu0 %v204
      %426 = vmatprep.subr.mxu0 %v212
      %427 = vmatpush1.msra.mxu0 %v211
      %428 = vmatprep.subr.mxu0 %v219
      %429 = vmatpush1.msra.mxu0 %v218
      %430 = vmatprep.subr.mxu0 %v226
      %431 = vmatpush1.msra.mxu0 %v225
      %432 = vmatprep.subr.mxu0 %v233
      %433 = vmatpush1.msra.mxu0 %v232
      %434 = vmatprep.subr.mxu0 %v269
      %435 = vmatpush1.msra.mxu0 %v266
      %436 = vmatprep.subr.mxu0 0.0
      %437 = vmatpush1.msra.mxu0 0.0
      %438 = vmatprep.subr.mxu0 0.0
      %439 = vmatpush1.msra.mxu0 0.0
      %440 = vmatprep.subr.mxu0 0.0
      %441 = vmatpush1.msra.mxu0 0.0
      %442 = vmatprep.subr.mxu0 0.0
      %443 = vmatpush1.msra.mxu0 0.0
      %444 = vmatprep.subr.mxu0 0.0
      %445 = vmatpush1.msra.mxu0 0.0
      %446 = vmatprep.subr.mxu0 0.0
      %447 = vmatpush1.msra.mxu0 0.0
      %448 = vmatprep.subr.mxu0 0.0
      %449 = vmatpush1.msra.mxu0 0.0
      %450 = vmatprep.subr.mxu0 0.0
      %451 = vmatpush1.msra.mxu0 0.0
      %452 = vmatprep.subr.mxu0 0.0
      %453 = vmatpush1.msra.mxu0 0.0
      %454 = vmatprep.subr.mxu0 0.0
      %455 = vmatpush1.msra.mxu0 0.0
      %456 = vmatprep.subr.mxu0 0.0
      %457 = vmatpush1.msra.mxu0 0.0
      %458 = vmatprep.subr.mxu0 0.0
      %459 = vmatpush1.msra.mxu0 0.0
      %460 = vmatprep.subr.mxu0 0.0
      %461 = vmatpush1.msra.mxu0 0.0
      %462 = vmatprep.subr.mxu0 0.0
      %463 = vmatpush1.msra.mxu0 0.0
      %464 = vmatprep.subr.mxu0 0.0
      %465 = vmatpush1.msra.mxu0 0.0
      %466 = vmatprep.subr.mxu0 0.0
      %467 = vmatpush1.msra.mxu0 0.0
      %468 = vmatprep.subr.mxu0 0.0
      %469 = vmatpush1.msra.mxu0 0.0
      %470 = vmatprep.subr.mxu0 0.0
      %471 = vmatpush1.msra.mxu0 0.0
      %472 = vmatprep.subr.mxu0 0.0
      %473 = vmatpush1.msra.mxu0 0.0
      %474 = vmatprep.subr.mxu0 0.0
      %475 = vmatpush1.msra.mxu0 0.0
      %476 = vmatprep.subr.mxu0 0.0
      %477 = vmatpush1.msra.mxu0 0.0
      %478 = vmatprep.subr.mxu0 0.0
      %479 = vmatpush1.msra.mxu0 0.0
      %480 = vmatprep.mubr.f32.mxu0 0.0
      %481 = vmatmul.mubr.f32.gmra.mrb[0].mxu0 %v250
      %v482 = vpop.f32.mrb[0].mxu0
      %v483 = vadd.f32 %v246, %v482
      %v484 = vpop.f32.mrb[0].mxu0
      %v485 = vadd.f32 %v246, %v484
      %486 = vdwg.mxu0
      %487 = vmatprep.subr.mxu0 0.0
      %488 = vmatpush1.msra.mxu0 %v178
      %489 = vmatprep.subr.mxu0 0.0
      %490 = vmatpush1.msra.mxu0 %v185
      %491 = vmatprep.subr.mxu0 0.0
      %492 = vmatpush1.msra.mxu0 %v192
      %493 = vmatprep.subr.mxu0 0.0
      %494 = vmatpush1.msra.mxu0 %v199
      %495 = vmatprep.subr.mxu0 0.0
      %496 = vmatpush1.msra.mxu0 %v206
      %497 = vmatprep.subr.mxu0 0.0
      %498 = vmatpush1.msra.mxu0 %v213
      %499 = vmatprep.subr.mxu0 0.0
      %500 = vmatpush1.msra.mxu0 %v220
      %501 = vmatprep.subr.mxu0 0.0
      %502 = vmatpush1.msra.mxu0 %v227
      %503 = vmatprep.subr.mxu0 0.0
      %504 = vmatpush1.msra.mxu0 %v234
      %505 = vmatprep.subr.mxu0 0.0
      %506 = vmatpush1.msra.mxu0 %v272
      %507 = vmatprep.subr.mxu0 0.0
      %508 = vmatpush1.msra.mxu0 0.0
      %509 = vmatprep.subr.mxu0 0.0
      %510 = vmatpush1.msra.mxu0 0.0
      %511 = vmatprep.subr.mxu0 0.0
      %512 = vmatpush1.msra.mxu0 0.0
      %513 = vmatprep.subr.mxu0 0.0
      %514 = vmatpush1.msra.mxu0 0.0
      %515 = vmatprep.subr.mxu0 0.0
      %516 = vmatpush1.msra.mxu0 0.0
      %517 = vmatprep.subr.mxu0 0.0
      %518 = vmatpush1.msra.mxu0 0.0
      %519 = vmatprep.subr.mxu0 0.0
      %520 = vmatpush1.msra.mxu0 0.0
      %521 = vmatprep.subr.mxu0 0.0
      %522 = vmatpush1.msra.mxu0 0.0
      %523 = vmatprep.subr.mxu0 0.0
      %524 = vmatpush1.msra.mxu0 0.0
      %525 = vmatprep.subr.mxu0 0.0
      %526 = vmatpush1.msra.mxu0 0.0
      %527 = vmatprep.subr.mxu0 0.0
      %528 = vmatpush1.msra.mxu0 0.0
      %529 = vmatprep.subr.mxu0 0.0
      %530 = vmatpush1.msra.mxu0 0.0
      %531 = vmatprep.subr.mxu0 0.0
      %532 = vmatpush1.msra.mxu0 0.0
      %533 = vmatprep.subr.mxu0 0.0
      %534 = vmatpush1.msra.mxu0 0.0
      %535 = vmatprep.subr.mxu0 0.0
      %536 = vmatpush1.msra.mxu0 0.0
      %537 = vmatprep.subr.mxu0 0.0
      %538 = vmatpush1.msra.mxu0 0.0
      %539 = vmatprep.subr.mxu0 0.0
      %540 = vmatpush1.msra.mxu0 0.0
      %541 = vmatprep.subr.mxu0 0.0
      %542 = vmatpush1.msra.mxu0 0.0
      %543 = vmatprep.subr.mxu0 0.0
      %544 = vmatpush1.msra.mxu0 0.0
      %545 = vmatprep.subr.mxu0 0.0
      %546 = vmatpush1.msra.mxu0 0.0
      %547 = vmatprep.subr.mxu0 0.0
      %548 = vmatpush1.msra.mxu0 0.0
      %549 = vmatprep.subr.mxu0 0.0
      %550 = vmatpush1.msra.mxu0 0.0
      %551 = vmatprep.mubr.f32.mxu0 0.0
      %552 = vmatmul.mubr.f32.gmra.mrb[0].mxu0 %v250
      %v553 = vpop.f32.mrb[0].mxu0
      %v554 = vadd.f32 %v246, %v553
      %v555 = vpop.f32.mrb[0].mxu0
      %556 = vdwg.mxu0
      %v557 = vmax.f32 %v341, 0.0
      %v558 = vmax.f32 %v343, 0.0
      %v559 = vmax.f32 %v412, 0.0
      %v560 = vmax.f32 %v414, 0.0
      %v561 = vmax.f32 %v483, 0.0
      %v562 = vmax.f32 %v485, 0.0
      %v563 = vmax.f32 %v554, 0.0
      %567 = vrot.lane.b32.xlu0 %v558, 60
      %v568 = vpop.permute.xlu0 %567
      %569 = vrot.lane.b32.xlu0 %v559, 60
      %v570 = vpop.permute.xlu0 %569
      %571 = vrot.lane.b32.xlu0 %v560, 60
      %v572 = vpop.permute.xlu0 %571
      %vm573 = vcmask 490496
      %v574 = vsel %vm573, %v568, %v570
      %v575 = vsel %vm573, %v570, %v572
      %v578 = vmax.f32 %v557, %v574
      %v579 = vmax.f32 %v558, %v575
      %583 = vrot.lane.b32.xlu0 %v561, 60
      %v584 = vpop.permute.xlu0 %583
      %585 = vrot.lane.b32.xlu0 %v562, 60
      %v586 = vpop.permute.xlu0 %585
      %587 = vrot.lane.b32.xlu0 %v563, 60
      %v588 = vpop.permute.xlu0 %587
      %v589 = vsel %vm573, %v584, %v586
      %v590 = vsel %vm573, %v586, %v588
      %v593 = vmax.f32 %v560, %v589
      %v594 = vmax.f32 %v561, %v590
      %597 = vrot.lane.b32.xlu0 %v593, 120
      %v598 = vpop.permute.xlu0 %597
      %599 = vrot.lane.b32.xlu0 %v594, 120
      %v600 = vpop.permute.xlu0 %599
      %vm601 = vcmask 982016
      %v602 = vsel %vm601, %v598, %v600
      %v605 = vmax.f32 %v578, %v602
      %v606 = vmax.f32 %v579, %v600
      %607 = vst [vmem:[%s170] sm:$0x3f] %v605
      %vm608 = vcmask 553984
      %609 = vst.msk [vmem:[%s170 + $0x8] sm:$0x3f] %vm608, %v606
      %p610 = scmp.lt.s32.totalorder %s14, 1
      %s611 = scalar_select %p610, %s14, 1
      %s612 = smul.addr %s611, 2
      %s613 = smul.addr %s612, 8
      %s614 = scalar_lea.vmem %s3, %s613
      // Predicated region
      $region33: #{_lenet_apply.3} parent=31 // pred_check
        %p615 = pneg %p100
      $region34: #{_lenet_apply.3} parent=31 // pred_check_branch
        %617 = sbr.rel (%p615) target = $region36
      $region35: #{_lenet_apply.3} parent=31 // pred_region
        _
      $region36: #{_lenet_apply.3} parent=31 // pred_fallthru
        _
    $region32: #{_lenet_apply.3} parent=5 // pred_fallthru
      _
    %p618 = scmp.le.s32.totalorder 2, %s9
    // Predicated region
    $region37: #{_lenet_apply.3} parent=5 // pred_check
      %p619 = pneg %p618
    $region38: #{_lenet_apply.3} parent=5 // pred_check_branch
      %621 = sbr.rel (%p619) target = $region40
    $region39: #{_lenet_apply.3} parent=5 // pred_region
      %s622 = ssub.s32 %s9, 2
      // Predicated region
      $region41: #{_lenet_apply.3} parent=39 // pred_check
        %p623 = pneg %p106
      $region42: #{_lenet_apply.3} parent=39 // pred_check_branch
        %625 = sbr.rel (%p623) target = $region44
      $region43: #{_lenet_apply.3} parent=39 // pred_region
        %p626 = scmp.lt.s32.totalorder %s15, 1
        %s627 = scalar_select %p626, %s15, 1
        %s628 = smul.addr %s627, 2
        %s629 = smul.addr %s628, 8
        %s630 = scalar_lea.vmem %s3, %s629
      $region44: #{_lenet_apply.3} parent=39 // pred_fallthru
        _
    $region40: #{_lenet_apply.3} parent=5 // pred_fallthru
      _
  $region6: #{_lenet_apply.3} parent=0 // loop_footer
    %s13 = sadd.s32 1, %s9
  $region7: #{_lenet_apply.3} parent=0 // loop_footer_branch
    %8 = sbr.rel target = $region3
  $region8: #{_lenet_apply.3} parent=0 // loop_exit
    _

// kernel: _lenet_apply.4
$region0: #{_lenet_apply.4}
  #allocation0 [shape = 'u32[]', space=smem, size = 0x4, offset = 0x4, fixed_abs, tag = 'smem constant byte address 0x4 - core index']
  #allocation1 [shape = 'u32[144,128]{1,0:T(1,128)}', space=vmem, size = 0x12000, scoped, tag = 'internal scratch']
  %s0 = inlined_call_operand.vmem [shape: f32[2,150,100], index: 0, kind: input, shape index: {}]
  %s1 = inlined_call_operand.vmem [shape: f32[16,150], index: 1, kind: input, shape index: {}]
  %s2 = inlined_call_operand.vmem [shape: f32[16,1], index: 2, kind: input, shape index: {}]
  %s3 = inlined_call_operand.vmem [shape: f32[2,16,25], index: 3, kind: output, shape index: {}]
  %s4 = sld [smem:[#allocation0]]
  $region45: #{_lenet_apply.4} parent=0
    _
  %s6 = ssub.s32 1, %s4
  %s7 = scalar_select 0, %s6, %s4
  loop: start=0, step=1, limit=4
  $region2: #{_lenet_apply.4} parent=0 // loop_pre_header
    _
  $region3: #{_lenet_apply.4} parent=0 // loop_header
    %s9 = sphi 0, %s13
    %p10 = scmp.ge.s32.totalorder %s9, 4
    %s19 = sphi 0, %s21
    %s22 = sphi 0, %s19
    %s23 = sphi 0, %s22
    %s39 = sphi 0, %s23
    %s43 = sphi 0, %s43
    %s45 = sphi 0, %s43
    %s46 = sphi 0, %s45
    %s60 = sphi 0, %s46
    %s64 = sphi 0, %s64
    %s66 = sphi 0, %s64
    %s67 = sphi 0, %s66
    %s81 = sphi 0, %s67
    %s87 = sphi 0, %s89
    %s90 = sphi 0, %s87
    %s91 = sphi 0, %s90
    %s107 = sphi 0, %s91
  $region4: #{_lenet_apply.4} parent=0 // loop_header_branch
    %12 = sbr.rel (%p10) target = $region8
  $region5: #{_lenet_apply.4} parent=0 // loop_body
    %s14 = ssub.s32 %s9, 1
    %s15 = ssub.s32 %s9, 2
    %s16 = sadd.s32 %s9, 1
    %s17 = ssub.s32 %s9, %s16
    %p18 = scmp.eq.s32.totalorder %s17, 0
    %s20 = sadd.s32 %s19, 1
    %s21 = scalar_select %p18, %s19, %s20
    %p24 = pneg %p18
    %p25 = scmp.eq.s32.totalorder %s9, 1
    %p26 = por %p24, %p25
    %p27 = scmp.ne.s32.totalorder %s19, %s22
    %p28 = scmp.eq.s32.totalorder %s9, 0
    %p29 = por %p27, %p28
    %p30 = scmp.ne.s32.totalorder %s19, %s22
    %p31 = scmp.eq.s32.totalorder %s14, 1
    %p32 = por %p30, %p31
    %p33 = scmp.ne.s32.totalorder %s22, %s23
    %p34 = scmp.eq.s32.totalorder %s14, 0
    %p35 = por %p33, %p34
    %p36 = scmp.ne.s32.totalorder %s22, %s23
    %p37 = scmp.eq.s32.totalorder %s15, 1
    %p38 = por %p36, %p37
    %p40 = scmp.ne.s32.totalorder %s23, %s39
    %p41 = scmp.eq.s32.totalorder %s15, 0
    %p42 = por %p40, %p41
    %s44 = sadd.s32 %s43, 1
    %p47 = scmp.eq.s32.totalorder %s9, 1
    %p48 = scmp.ne.s32.totalorder %s43, %s45
    %p49 = scmp.eq.s32.totalorder %s9, 0
    %p50 = por %p48, %p49
    %p51 = scmp.ne.s32.totalorder %s43, %s45
    %p52 = scmp.eq.s32.totalorder %s14, 1
    %p53 = por %p51, %p52
    %p54 = scmp.ne.s32.totalorder %s45, %s46
    %p55 = scmp.eq.s32.totalorder %s14, 0
    %p56 = por %p54, %p55
    %p57 = scmp.ne.s32.totalorder %s45, %s46
    %p58 = scmp.eq.s32.totalorder %s15, 1
    %p59 = por %p57, %p58
    %p61 = scmp.ne.s32.totalorder %s46, %s60
    %p62 = scmp.eq.s32.totalorder %s15, 0
    %p63 = por %p61, %p62
    %s65 = sadd.s32 %s64, 1
    %p68 = scmp.eq.s32.totalorder %s9, 1
    %p69 = scmp.ne.s32.totalorder %s64, %s66
    %p70 = scmp.eq.s32.totalorder %s9, 0
    %p71 = por %p69, %p70
    %p72 = scmp.ne.s32.totalorder %s64, %s66
    %p73 = scmp.eq.s32.totalorder %s14, 1
    %p74 = por %p72, %p73
    %p75 = scmp.ne.s32.totalorder %s66, %s67
    %p76 = scmp.eq.s32.totalorder %s14, 0
    %p77 = por %p75, %p76
    %p78 = scmp.ne.s32.totalorder %s66, %s67
    %p79 = scmp.eq.s32.totalorder %s15, 1
    %p80 = por %p78, %p79
    %p82 = scmp.ne.s32.totalorder %s67, %s81
    %p83 = scmp.eq.s32.totalorder %s15, 0
    %p84 = por %p82, %p83
    %s85 = ssub.s32 %s9, %s16
    %p86 = scmp.eq.s32.totalorder %s85, 0
    %s88 = sadd.s32 %s87, 1
    %s89 = scalar_select %p86, %s87, %s88
    %p92 = pneg %p86
    %p93 = scmp.eq.s32.totalorder %s9, 1
    %p94 = por %p92, %p93
    %p95 = scmp.ne.s32.totalorder %s87, %s90
    %p96 = scmp.eq.s32.totalorder %s9, 0
    %p97 = por %p95, %p96
    %p98 = scmp.ne.s32.totalorder %s87, %s90
    %p99 = scmp.eq.s32.totalorder %s14, 1
    %p100 = por %p98, %p99
    %p101 = scmp.ne.s32.totalorder %s90, %s91
    %p102 = scmp.eq.s32.totalorder %s14, 0
    %p103 = por %p101, %p102
    %p104 = scmp.ne.s32.totalorder %s90, %s91
    %p105 = scmp.eq.s32.totalorder %s15, 1
    %p106 = por %p104, %p105
    %p108 = scmp.ne.s32.totalorder %s91, %s107
    %p109 = scmp.eq.s32.totalorder %s15, 0
    %p110 = por %p108, %p109
    %p111 = scmp.le.s32.totalorder 1, %s9
    %p112 = scmp.lt.s32.totalorder %s9, 3
    %p113 = pnand %p111, %p112
    %p114 = pneg %p113
    // Predicated region
    $region9: #{_lenet_apply.4} parent=5 // pred_check
      _
    $region10: #{_lenet_apply.4} parent=5 // pred_check_branch
      %116 = sbr.rel (%p113) target = $region12
    $region11: #{_lenet_apply.4} parent=5 // pred_region
      %s117 = ssub.s32 %s9, 1
      // Predicated region
      $region13: #{_lenet_apply.4} parent=11 // pred_check
        %p118 = pneg %p56
      $region14: #{_lenet_apply.4} parent=11 // pred_check_branch
        %120 = sbr.rel (%p118) target = $region16
      $region15: #{_lenet_apply.4} parent=11 // pred_region
        _
      $region16: #{_lenet_apply.4} parent=11 // pred_fallthru
        _
      // Predicated region
      $region17: #{_lenet_apply.4} parent=11 // pred_check
        %p121 = pneg %p77
      $region18: #{_lenet_apply.4} parent=11 // pred_check_branch
        %123 = sbr.rel (%p121) target = $region20
      $region19: #{_lenet_apply.4} parent=11 // pred_region
        _
      $region20: #{_lenet_apply.4} parent=11 // pred_fallthru
        _
    $region12: #{_lenet_apply.4} parent=5 // pred_fallthru
      _
    %p124 = scmp.lt.s32.totalorder %s9, 2
    // Predicated region
    $region21: #{_lenet_apply.4} parent=5 // pred_check
      %p125 = pneg %p124
    $region22: #{_lenet_apply.4} parent=5 // pred_check_branch
      %127 = sbr.rel (%p125) target = $region24
    $region23: #{_lenet_apply.4} parent=5 // pred_region
      // Predicated region
      $region25: #{_lenet_apply.4} parent=23 // pred_check
        %p128 = pneg %p29
      $region26: #{_lenet_apply.4} parent=23 // pred_check_branch
        %130 = sbr.rel (%p128) target = $region28
      $region27: #{_lenet_apply.4} parent=23 // pred_region
        %p131 = scmp.lt.s32.totalorder %s9, 1
        %s132 = scalar_select %p131, %s9, 1
        %s133 = smul.addr %s132, 19
        %s134 = smul.addr %s133, 8
        %s135 = scalar_lea.vmem %s0, %s134
      $region28: #{_lenet_apply.4} parent=23 // pred_fallthru
        _
    $region24: #{_lenet_apply.4} parent=5 // pred_fallthru
      _
    %p136 = scmp.le.s32.totalorder 1, %s9
    %p137 = scmp.lt.s32.totalorder %s9, 3
    %p138 = pnand %p136, %p137
    %p139 = pneg %p138
    // Predicated region
    $region29: #{_lenet_apply.4} parent=5 // pred_check
      _
    $region30: #{_lenet_apply.4} parent=5 // pred_check_branch
      %141 = sbr.rel (%p138) target = $region32
    $region31: #{_lenet_apply.4} parent=5 // pred_region
      %s142 = ssub.s32 %s9, 1
      %p143 = scmp.lt.s32.totalorder %s14, 1
      %s144 = scalar_select %p143, %s14, 1
      %s145 = smul.addr %s144, 19
      %s146 = smul.addr %s145, 8
      %s147 = scalar_lea.vmem %s0, %s146
      %p148 = pneg %p35
      %p149 = pneg %p32
      %p150 = pneg %p56
      %p151 = pneg %p53
      %p152 = pneg %p77
      %p153 = pneg %p74
      %p154 = pneg %p103
      %p155 = pneg %p100
      %p156 = scmp.lt.s32.totalorder %s14, 1
      %s157 = scalar_select %p156, %s14, 1
      %s158 = smul.addr %s157, 2
      %s159 = smul.addr %s158, 8
      %s160 = scalar_lea.vmem %s3, %s159
      %p161 = scmp.lt.s32.totalorder %s14, 1
      %s162 = scalar_select %p161, %s14, 1
      %s163 = smul.addr %s162, 19
      %s164 = smul.addr %s163, 8
      %s165 = scalar_lea.vmem %s0, %s164
      %p166 = scmp.lt.s32.totalorder %s14, 1
      %s167 = scalar_select %p166, %s14, 1
      %s168 = smul.addr %s167, 2
      %s169 = smul.addr %s168, 8
      %s170 = scalar_lea.vmem %s3, %s169
      %v171 = vld [vmem:[%s1] sm:$0xff]
      %v172 = vld [vmem:[%s1 + $0x8] sm:$0xff]
      %v173 = vld [vmem:[%s1 + $0x10] sm:$0xff]
      %v174 = vld [vmem:[%s1 + $0x18] sm:$0xff]
      %v175 = vld [vmem:[%s165] sm:$0xff]
      %v176 = vld [vmem:[%s165 + $0x8] sm:$0xff]
      %v177 = vld [vmem:[%s165 + $0x10] sm:$0xff]
      %v178 = vld [vmem:[%s165 + $0x18] sm:$0xff]
      %v179 = vld [vmem:[%s165 + $0x20] sm:$0xff]
      %v180 = vld [vmem:[%s165 + $0x28] sm:$0xff]
      %v181 = vld [vmem:[%s165 + $0x30] sm:$0xff]
      %v182 = vld [vmem:[%s165 + $0x38] sm:$0xff]
      %v183 = vld [vmem:[%s165 + $0x40] sm:$0xff]
      %v184 = vld [vmem:[%s165 + $0x48] sm:$0xff]
      %v185 = vld [vmem:[%s165 + $0x50] sm:$0xff]
      %v186 = vld [vmem:[%s165 + $0x58] sm:$0xff]
      %v187 = vld [vmem:[%s165 + $0x60] sm:$0xff]
      %v188 = vld [vmem:[%s165 + $0x68] sm:$0xff]
      %v189 = vld [vmem:[%s165 + $0x70] sm:$0xff]
      %v190 = vld [vmem:[%s165 + $0x78] sm:$0xff]
      %v191 = vld [vmem:[%s165 + $0x80] sm:$0xff]
      %v192 = vld [vmem:[%s165 + $0x88] sm:$0xff]
      %v193 = vld [vmem:[%s165 + $0x90] sm:$0x3f]
      %v194 = vld [vmem:[%s2] sm:$0xff]
      %v195 = vld [vmem:[%s2 + $0x8] sm:$0xff]
      %197 = vset.pattern.permute.xlu0 0
      %198 = vperm.xlu0 %197, %v194
      %v199 = vpop.permute.xlu0 %198
      %202 = vset.pattern.permute.xlu0 0
      %203 = vperm.xlu0 %202, %v195
      %v204 = vpop.permute.xlu0 %203
      %vm206 = vcmask 179200
      %v208 = vsel %vm206, %v172, 0
      %v211 = vsel %vm206, %v174, 0
      %vm213 = vcmask 1045504
      %v215 = vsel %vm213, %v193, 0
      %217 = vmatprep.subr.mxu0 0.0
      %218 = vmatpush1.msra.mxu0 %v175
      %219 = vmatprep.subr.mxu0 0.0
      %220 = vmatpush1.msra.mxu0 %v176
      %221 = vmatprep.subr.mxu0 0.0
      %222 = vmatpush1.msra.mxu0 %v177
      %223 = vmatprep.subr.mxu0 0.0
      %224 = vmatpush1.msra.mxu0 %v178
      %225 = vmatprep.subr.mxu0 0.0
      %226 = vmatpush1.msra.mxu0 %v179
      %227 = vmatprep.subr.mxu0 0.0
      %228 = vmatpush1.msra.mxu0 %v180
      %229 = vmatprep.subr.mxu0 0.0
      %230 = vmatpush1.msra.mxu0 %v181
      %231 = vmatprep.subr.mxu0 0.0
      %232 = vmatpush1.msra.mxu0 %v182
      %233 = vmatprep.subr.mxu0 0.0
      %234 = vmatpush1.msra.mxu0 %v183
      %235 = vmatprep.subr.mxu0 0.0
      %236 = vmatpush1.msra.mxu0 %v184
      %237 = vmatprep.subr.mxu0 0.0
      %238 = vmatpush1.msra.mxu0 %v185
      %239 = vmatprep.subr.mxu0 0.0
      %240 = vmatpush1.msra.mxu0 %v186
      %241 = vmatprep.subr.mxu0 0.0
      %242 = vmatpush1.msra.mxu0 %v187
      %243 = vmatprep.subr.mxu0 0.0
      %244 = vmatpush1.msra.mxu0 %v188
      %245 = vmatprep.subr.mxu0 0.0
      %246 = vmatpush1.msra.mxu0 %v189
      %247 = vmatprep.subr.mxu0 0.0
      %248 = vmatpush1.msra.mxu0 %v190
      %249 = vmatprep.subr.mxu0 0.0
      %250 = vmatpush1.msra.mxu0 %v191
      %251 = vmatprep.subr.mxu0 0.0
      %252 = vmatpush1.msra.mxu0 %v192
      %253 = vmatprep.subr.mxu0 0.0
      %254 = vmatpush1.msra.mxu0 %v215
      %255 = vmatprep.subr.mxu0 0.0
      %256 = vmatpush1.msra.mxu0 0.0
      %257 = vmatprep.subr.mxu0 0.0
      %258 = vmatpush1.msra.mxu0 0.0
      %259 = vmatprep.subr.mxu0 0.0
      %260 = vmatpush1.msra.mxu0 0.0
      %261 = vmatprep.subr.mxu0 0.0
      %262 = vmatpush1.msra.mxu0 0.0
      %263 = vmatprep.subr.mxu0 0.0
      %264 = vmatpush1.msra.mxu0 0.0
      %265 = vmatprep.subr.mxu0 0.0
      %266 = vmatpush1.msra.mxu0 0.0
      %267 = vmatprep.subr.mxu0 0.0
      %268 = vmatpush1.msra.mxu0 0.0
      %269 = vmatprep.subr.mxu0 0.0
      %270 = vmatpush1.msra.mxu0 0.0
      %271 = vmatprep.subr.mxu0 0.0
      %272 = vmatpush1.msra.mxu0 0.0
      %273 = vmatprep.subr.mxu0 0.0
      %274 = vmatpush1.msra.mxu0 0.0
      %275 = vmatprep.subr.mxu0 0.0
      %276 = vmatpush1.msra.mxu0 0.0
      %277 = vmatprep.subr.mxu0 0.0
      %278 = vmatpush1.msra.mxu0 0.0
      %279 = vmatprep.subr.mxu0 0.0
      %280 = vmatpush1.msra.mxu0 0.0
      %281 = vmatprep.mubr.f32.mxu0 %v208
      %282 = vmatmul.mubr.f32.gmra.mrb[0].mxu0 %v171
      %v283 = vpop.f32.mrb[0].mxu0
      %v284 = vadd.f32 %v199, %v283
      %v285 = vpop.f32.mrb[0].mxu0
      %286 = vmatprep.mubr.f32.mxu0 %v211
      %287 = vmatmul.mubr.f32.gmra.mrb[0].mxu0 %v173
      %v288 = vpop.f32.mrb[0].mxu0
      %v289 = vadd.f32 %v204, %v288
      %v290 = vpop.f32.mrb[0].mxu0
      %291 = vdwg.mxu0
      %v292 = vmax.f32 %v284, 0.0
      %v293 = vmax.f32 %v289, 0.0
      %296 = vrot.lane.b32.xlu0 %v292, 103
      %v297 = vpop.permute.xlu0 %296
      %298 = vrot.lane.b32.xlu0 %v293, 103
      %v299 = vpop.permute.xlu0 %298
      %v302 = vmax.f32 %v292, %v297
      %v303 = vmax.f32 %v293, %v299
      %306 = vrot.lane.b32.xlu0 %v302, 78
      %v307 = vpop.permute.xlu0 %306
      %308 = vrot.lane.b32.xlu0 %v303, 78
      %v309 = vpop.permute.xlu0 %308
      %v312 = vmax.f32 %v302, %v307
      %v313 = vmax.f32 %v303, %v309
      %vm314 = vcmask 203776
      %315 = vst.msk [vmem:[%s170] sm:$0xff] %vm314, %v312
      %316 = vst.msk [vmem:[%s170 + $0x8] sm:$0xff] %vm314, %v313
      %p317 = scmp.lt.s32.totalorder %s14, 1
      %s318 = scalar_select %p317, %s14, 1
      %s319 = smul.addr %s318, 2
      %s320 = smul.addr %s319, 8
      %s321 = scalar_lea.vmem %s3, %s320
      // Predicated region
      $region33: #{_lenet_apply.4} parent=31 // pred_check
        %p322 = pneg %p100
      $region34: #{_lenet_apply.4} parent=31 // pred_check_branch
        %324 = sbr.rel (%p322) target = $region36
      $region35: #{_lenet_apply.4} parent=31 // pred_region
        _
      $region36: #{_lenet_apply.4} parent=31 // pred_fallthru
        _
    $region32: #{_lenet_apply.4} parent=5 // pred_fallthru
      _
    %p325 = scmp.le.s32.totalorder 2, %s9
    // Predicated region
    $region37: #{_lenet_apply.4} parent=5 // pred_check
      %p326 = pneg %p325
    $region38: #{_lenet_apply.4} parent=5 // pred_check_branch
      %328 = sbr.rel (%p326) target = $region40
    $region39: #{_lenet_apply.4} parent=5 // pred_region
      %s329 = ssub.s32 %s9, 2
      // Predicated region
      $region41: #{_lenet_apply.4} parent=39 // pred_check
        %p330 = pneg %p106
      $region42: #{_lenet_apply.4} parent=39 // pred_check_branch
        %332 = sbr.rel (%p330) target = $region44
      $region43: #{_lenet_apply.4} parent=39 // pred_region
        %p333 = scmp.lt.s32.totalorder %s15, 1
        %s334 = scalar_select %p333, %s15, 1
        %s335 = smul.addr %s334, 2
        %s336 = smul.addr %s335, 8
        %s337 = scalar_lea.vmem %s3, %s336
      $region44: #{_lenet_apply.4} parent=39 // pred_fallthru
        _
    $region40: #{_lenet_apply.4} parent=5 // pred_fallthru
      _
  $region6: #{_lenet_apply.4} parent=0 // loop_footer
    %s13 = sadd.s32 1, %s9
  $region7: #{_lenet_apply.4} parent=0 // loop_footer_branch
    %8 = sbr.rel target = $region3
  $region8: #{_lenet_apply.4} parent=0 // loop_exit
    _

// kernel: _lenet_apply.5
$region0: #{_lenet_apply.5}
  #allocation0 [shape = 'u32[]', space=smem, size = 0x4, offset = 0x4, fixed_abs, tag = 'smem constant byte address 0x4 - core index']
  #allocation1 [shape = 'u32[144,128]{1,0:T(1,128)}', space=vmem, size = 0x12000, scoped, tag = 'internal scratch']
  %s0 = inlined_call_operand.vmem [shape: f32[2,400], index: 0, kind: input, shape index: {}]
  %s1 = inlined_call_operand.vmem [shape: f32[400,256], index: 1, kind: input, shape index: {}]
  %s2 = inlined_call_operand.vmem [shape: f32[1,256], index: 2, kind: input, shape index: {}]
  %s3 = inlined_call_operand.vmem [shape: f32[256,128], index: 3, kind: input, shape index: {}]
  %s4 = inlined_call_operand.vmem [shape: f32[1,128], index: 4, kind: input, shape index: {}]
  %s5 = inlined_call_operand.vmem [shape: f32[128,100], index: 5, kind: input, shape index: {}]
  %s6 = inlined_call_operand.vmem [shape: f32[1,100], index: 6, kind: input, shape index: {}]
  %s7 = inlined_call_operand.hbm [shape: f32[2,100], index: 7, kind: output, shape index: {}]
  %s8 = sld [smem:[#allocation0]]
  $region38: #{_lenet_apply.5} parent=0
    _
  %s10 = ssub.s32 1, %s8
  %s11 = scalar_select 0, %s10, %s8
  $region1: #{_lenet_apply.5} parent=0
    #allocation2 [shape = 'u8[1024]{0}', space=vmem, size = 0x400, scoped, tag = 'output window, operand 0, single buffered']
    #allocation3 [shape = 's32[1]{0}', space=sflag, size = 0x4, scoped, tag = 'scoped memory for _lenet_apply.5']
    %12 = vsyncpa [#allocation3], 0
    // Predicated region
    $region2: #{_lenet_apply.5} parent=1 // pred_check
      _
    $region3: #{_lenet_apply.5} parent=1 // pred_check_branch
      %14 = sbr.rel (0) target = $region5
    $region4: #{_lenet_apply.5} parent=1 // pred_region
      _
    $region5: #{_lenet_apply.5} parent=1 // pred_fallthru
      _
    // Predicated region
    $region6: #{_lenet_apply.5} parent=1 // pred_check
      _
    $region7: #{_lenet_apply.5} parent=1 // pred_check_branch
      %16 = sbr.rel (0) target = $region9
    $region8: #{_lenet_apply.5} parent=1 // pred_region
      _
    $region9: #{_lenet_apply.5} parent=1 // pred_fallthru
      _
    // Predicated region
    $region10: #{_lenet_apply.5} parent=1 // pred_check
      _
    $region11: #{_lenet_apply.5} parent=1 // pred_check_branch
      %18 = sbr.rel (0) target = $region13
    $region12: #{_lenet_apply.5} parent=1 // pred_region
      _
    $region13: #{_lenet_apply.5} parent=1 // pred_fallthru
      _
    // Predicated region
    $region14: #{_lenet_apply.5} parent=1 // pred_check
      _
    $region15: #{_lenet_apply.5} parent=1 // pred_check_branch
      %20 = sbr.rel (0) target = $region17
    $region16: #{_lenet_apply.5} parent=1 // pred_region
      _
    $region17: #{_lenet_apply.5} parent=1 // pred_fallthru
      _
    // Predicated region
    $region18: #{_lenet_apply.5} parent=1 // pred_check
      _
    $region19: #{_lenet_apply.5} parent=1 // pred_check_branch
      %22 = sbr.rel (0) target = $region21
    $region20: #{_lenet_apply.5} parent=1 // pred_region
      _
    $region21: #{_lenet_apply.5} parent=1 // pred_fallthru
      _
    // Predicated region
    $region22: #{_lenet_apply.5} parent=1 // pred_check
      _
    $region23: #{_lenet_apply.5} parent=1 // pred_check_branch
      %24 = sbr.rel (0) target = $region25
    $region24: #{_lenet_apply.5} parent=1 // pred_region
      _
    $region25: #{_lenet_apply.5} parent=1 // pred_fallthru
      _
    // Predicated region
    $region26: #{_lenet_apply.5} parent=1 // pred_check
      _
    $region27: #{_lenet_apply.5} parent=1 // pred_check_branch
      %26 = sbr.rel (0) target = $region29
    $region28: #{_lenet_apply.5} parent=1 // pred_region
      _
    $region29: #{_lenet_apply.5} parent=1 // pred_fallthru
      _
    %v27 = vld [vmem:[%s0] sm:$0xff]
    %v28 = vld [vmem:[%s1] sm:$0xff]
    %v29 = vld [vmem:[%s1 + $0x8] sm:$0xff]
    %v30 = vld [vmem:[%s1 + $0x10] sm:$0xff]
    %v31 = vld [vmem:[%s1 + $0x18] sm:$0xff]
    %v32 = vld [vmem:[%s1 + $0x20] sm:$0xff]
    %v33 = vld [vmem:[%s1 + $0x28] sm:$0xff]
    %v34 = vld [vmem:[%s1 + $0x30] sm:$0xff]
    %v35 = vld [vmem:[%s1 + $0x38] sm:$0xff]
    %v36 = vld [vmem:[%s1 + $0x40] sm:$0xff]
    %v37 = vld [vmem:[%s1 + $0x48] sm:$0xff]
    %v38 = vld [vmem:[%s1 + $0x50] sm:$0xff]
    %v39 = vld [vmem:[%s1 + $0x58] sm:$0xff]
    %v40 = vld [vmem:[%s1 + $0x60] sm:$0xff]
    %v41 = vld [vmem:[%s1 + $0x68] sm:$0xff]
    %v42 = vld [vmem:[%s1 + $0x70] sm:$0xff]
    %v43 = vld [vmem:[%s1 + $0x78] sm:$0xff]
    %v44 = vld [vmem:[%s1 + $0x80] sm:$0xff]
    %v45 = vld [vmem:[%s1 + $0x88] sm:$0xff]
    %v46 = vld [vmem:[%s1 + $0x90] sm:$0xff]
    %v47 = vld [vmem:[%s1 + $0x98] sm:$0xff]
    %v48 = vld [vmem:[%s1 + $0xa0] sm:$0xff]
    %v49 = vld [vmem:[%s1 + $0xa8] sm:$0xff]
    %v50 = vld [vmem:[%s1 + $0xb0] sm:$0xff]
    %v51 = vld [vmem:[%s1 + $0xb8] sm:$0xff]
    %v52 = vld [vmem:[%s1 + $0xc0] sm:$0xff]
    %v53 = vld [vmem:[%s1 + $0xc8] sm:$0xff]
    %v54 = vld [vmem:[%s1 + $0xd0] sm:$0xff]
    %v55 = vld [vmem:[%s1 + $0xd8] sm:$0xff]
    %v56 = vld [vmem:[%s1 + $0xe0] sm:$0xff]
    %v57 = vld [vmem:[%s1 + $0xe8] sm:$0xff]
    %v58 = vld [vmem:[%s1 + $0xf0] sm:$0xff]
    %v59 = vld [vmem:[%s1 + $0xf8] sm:$0xff]
    %v60 = vld [vmem:[%s1 + $0x100] sm:$0xff]
    %v61 = vld [vmem:[%s1 + $0x108] sm:$0xff]
    %v62 = vld [vmem:[%s1 + $0x110] sm:$0xff]
    %v63 = vld [vmem:[%s1 + $0x118] sm:$0xff]
    %v64 = vld [vmem:[%s1 + $0x120] sm:$0xff]
    %v65 = vld [vmem:[%s1 + $0x128] sm:$0xff]
    %v66 = vld [vmem:[%s1 + $0x130] sm:$0xff]
    %v67 = vld [vmem:[%s1 + $0x138] sm:$0xff]
    %v68 = vld [vmem:[%s1 + $0x140] sm:$0xff]
    %v69 = vld [vmem:[%s1 + $0x148] sm:$0xff]
    %v70 = vld [vmem:[%s1 + $0x150] sm:$0xff]
    %v71 = vld [vmem:[%s1 + $0x158] sm:$0xff]
    %v72 = vld [vmem:[%s1 + $0x160] sm:$0xff]
    %v73 = vld [vmem:[%s1 + $0x168] sm:$0xff]
    %v74 = vld [vmem:[%s1 + $0x170] sm:$0xff]
    %v75 = vld [vmem:[%s1 + $0x178] sm:$0xff]
    %v76 = vld [vmem:[%s1 + $0x180] sm:$0xff]
    %v77 = vld [vmem:[%s1 + $0x188] sm:$0xff]
    %v78 = vld [vmem:[%s1 + $0x190] sm:$0xff]
    %v79 = vld [vmem:[%s1 + $0x198] sm:$0xff]
    %v80 = vld [vmem:[%s1 + $0x1a0] sm:$0xff]
    %v81 = vld [vmem:[%s1 + $0x1a8] sm:$0xff]
    %v82 = vld [vmem:[%s1 + $0x1b0] sm:$0xff]
    %v83 = vld [vmem:[%s1 + $0x1b8] sm:$0xff]
    %v84 = vld [vmem:[%s1 + $0x1c0] sm:$0xff]
    %v85 = vld [vmem:[%s1 + $0x1c8] sm:$0xff]
    %v86 = vld [vmem:[%s1 + $0x1d0] sm:$0xff]
    %v87 = vld [vmem:[%s1 + $0x1d8] sm:$0xff]
    %v88 = vld [vmem:[%s1 + $0x1e0] sm:$0xff]
    %v89 = vld [vmem:[%s1 + $0x1e8] sm:$0xff]
    %v90 = vld [vmem:[%s1 + $0x1f0] sm:$0xff]
    %v91 = vld [vmem:[%s1 + $0x1f8] sm:$0xff]
    %v92 = vld [vmem:[%s1 + $0x200] sm:$0xff]
    %v93 = vld [vmem:[%s1 + $0x208] sm:$0xff]
    %v94 = vld [vmem:[%s1 + $0x210] sm:$0xff]
    %v95 = vld [vmem:[%s1 + $0x218] sm:$0xff]
    %v96 = vld [vmem:[%s1 + $0x220] sm:$0xff]
    %v97 = vld [vmem:[%s1 + $0x228] sm:$0xff]
    %v98 = vld [vmem:[%s1 + $0x230] sm:$0xff]
    %v99 = vld [vmem:[%s1 + $0x238] sm:$0xff]
    %v100 = vld [vmem:[%s1 + $0x240] sm:$0xff]
    %v101 = vld [vmem:[%s1 + $0x248] sm:$0xff]
    %v102 = vld [vmem:[%s1 + $0x250] sm:$0xff]
    %v103 = vld [vmem:[%s1 + $0x258] sm:$0xff]
    %v104 = vld [vmem:[%s1 + $0x260] sm:$0xff]
    %v105 = vld [vmem:[%s1 + $0x268] sm:$0xff]
    %v106 = vld [vmem:[%s1 + $0x270] sm:$0xff]
    %v107 = vld [vmem:[%s1 + $0x278] sm:$0xff]
    %v108 = vld [vmem:[%s1 + $0x280] sm:$0xff]
    %v109 = vld [vmem:[%s1 + $0x288] sm:$0xff]
    %v110 = vld [vmem:[%s1 + $0x290] sm:$0xff]
    %v111 = vld [vmem:[%s1 + $0x298] sm:$0xff]
    %v112 = vld [vmem:[%s1 + $0x2a0] sm:$0xff]
    %v113 = vld [vmem:[%s1 + $0x2a8] sm:$0xff]
    %v114 = vld [vmem:[%s1 + $0x2b0] sm:$0xff]
    %v115 = vld [vmem:[%s1 + $0x2b8] sm:$0xff]
    %v116 = vld [vmem:[%s1 + $0x2c0] sm:$0xff]
    %v117 = vld [vmem:[%s1 + $0x2c8] sm:$0xff]
    %v118 = vld [vmem:[%s1 + $0x2d0] sm:$0xff]
    %v119 = vld [vmem:[%s1 + $0x2d8] sm:$0xff]
    %v120 = vld [vmem:[%s1 + $0x2e0] sm:$0xff]
    %v121 = vld [vmem:[%s1 + $0x2e8] sm:$0xff]
    %v122 = vld [vmem:[%s1 + $0x2f0] sm:$0xff]
    %v123 = vld [vmem:[%s1 + $0x2f8] sm:$0xff]
    %v124 = vld [vmem:[%s1 + $0x300] sm:$0xff]
    %v125 = vld [vmem:[%s1 + $0x308] sm:$0xff]
    %v126 = vld [vmem:[%s1 + $0x310] sm:$0xff]
    %v127 = vld [vmem:[%s1 + $0x318] sm:$0xff]
    %v128 = vld [vmem:[%s2] sm:$0x3]
    %v130 = vlaneseq
    %v131 = vshrl.u32 %v130, 7
    %v132 = vsub.s32 0, %v131
    %v133 = vrot.slane %v128, %v132
    %v134 = vlaneseq
    %v135 = vshrl.u32 %v134, 7
    %v136 = vsub.s32 1, %v135
    %v137 = vrot.slane %v128, %v136
    %v141 = vcombine.high %v27, %v27
    %v143 = vunpack.c.l.s4 1983009808
    %v144 = vunpack.c.0.s8 %v143
    %v145 = vlaneseq
    %v146 = vshrl.u32 %v145, 7
    %v147 = vsub.s32 %v144, %v146
    %v148 = vrot.slane %v27, %v147
    %v150 = vunpack.c.l.s4 1983009808
    %v151 = vunpack.c.0.s8 %v150
    %v152 = vlaneseq
    %v153 = vshrl.u32 %v152, 7
    %v154 = vsub.s32 %v151, %v153
    %v155 = vrot.slane %v141, %v154
    %v156 = vcombine.high %v148, %v148
    %v157 = vcombine.high %v155, %v155
    %vm161 = vcmask 130048
    %v162 = vsel %vm161, %v157, 0
    %164 = vmatprep.subr.mxu0 %v29
    %165 = vmatpush1.msra.mxu0 %v28
    %166 = vmatprep.subr.mxu0 %v31
    %167 = vmatpush1.msra.mxu0 %v30
    %168 = vmatprep.subr.mxu0 %v33
    %169 = vmatpush1.msra.mxu0 %v32
    %170 = vmatprep.subr.mxu0 %v35
    %171 = vmatpush1.msra.mxu0 %v34
    %172 = vmatprep.subr.mxu0 %v37
    %173 = vmatpush1.msra.mxu0 %v36
    %174 = vmatprep.subr.mxu0 %v39
    %175 = vmatpush1.msra.mxu0 %v38
    %176 = vmatprep.subr.mxu0 %v41
    %177 = vmatpush1.msra.mxu0 %v40
    %178 = vmatprep.subr.mxu0 %v43
    %179 = vmatpush1.msra.mxu0 %v42
    %180 = vmatprep.subr.mxu0 %v45
    %181 = vmatpush1.msra.mxu0 %v44
    %182 = vmatprep.subr.mxu0 %v47
    %183 = vmatpush1.msra.mxu0 %v46
    %184 = vmatprep.subr.mxu0 %v49
    %185 = vmatpush1.msra.mxu0 %v48
    %186 = vmatprep.subr.mxu0 %v51
    %187 = vmatpush1.msra.mxu0 %v50
    %188 = vmatprep.subr.mxu0 %v53
    %189 = vmatpush1.msra.mxu0 %v52
    %190 = vmatprep.subr.mxu0 %v55
    %191 = vmatpush1.msra.mxu0 %v54
    %192 = vmatprep.subr.mxu0 %v57
    %193 = vmatpush1.msra.mxu0 %v56
    %194 = vmatprep.subr.mxu0 %v59
    %195 = vmatpush1.msra.mxu0 %v58
    %196 = vmatprep.subr.mxu0 %v61
    %197 = vmatpush1.msra.mxu0 %v60
    %198 = vmatprep.subr.mxu0 %v63
    %199 = vmatpush1.msra.mxu0 %v62
    %200 = vmatprep.subr.mxu0 %v65
    %201 = vmatpush1.msra.mxu0 %v64
    %202 = vmatprep.subr.mxu0 %v67
    %203 = vmatpush1.msra.mxu0 %v66
    %204 = vmatprep.subr.mxu0 %v69
    %205 = vmatpush1.msra.mxu0 %v68
    %206 = vmatprep.subr.mxu0 %v71
    %207 = vmatpush1.msra.mxu0 %v70
    %208 = vmatprep.subr.mxu0 %v73
    %209 = vmatpush1.msra.mxu0 %v72
    %210 = vmatprep.subr.mxu0 %v75
    %211 = vmatpush1.msra.mxu0 %v74
    %212 = vmatprep.subr.mxu0 %v77
    %213 = vmatpush1.msra.mxu0 %v76
    %214 = vmatprep.subr.mxu0 %v79
    %215 = vmatpush1.msra.mxu0 %v78
    %216 = vmatprep.subr.mxu0 %v81
    %217 = vmatpush1.msra.mxu0 %v80
    %218 = vmatprep.subr.mxu0 %v83
    %219 = vmatpush1.msra.mxu0 %v82
    %220 = vmatprep.subr.mxu0 %v85
    %221 = vmatpush1.msra.mxu0 %v84
    %222 = vmatprep.subr.mxu0 %v87
    %223 = vmatpush1.msra.mxu0 %v86
    %224 = vmatprep.subr.mxu0 %v89
    %225 = vmatpush1.msra.mxu0 %v88
    %226 = vmatprep.subr.mxu0 %v91
    %227 = vmatpush1.msra.mxu0 %v90
    %228 = vmatprep.mubr.f32.mxu0 %v156
    %229 = vmatmul.mubr.f32.gmra.mrb[0].mxu0 %v148
    %v230 = vpop.f32.mrb[0].mxu0
    %v231 = vadd.f32 %v133, %v230
    %v232 = vpop.f32.mrb[0].mxu0
    %v233 = vadd.f32 %v137, %v232
    %234 = vdwg.mxu0
    %235 = vmatprep.subr.mxu0 %v93
    %236 = vmatpush1.msra.mxu0 %v92
    %237 = vmatprep.subr.mxu0 %v95
    %238 = vmatpush1.msra.mxu0 %v94
    %239 = vmatprep.subr.mxu0 %v97
    %240 = vmatpush1.msra.mxu0 %v96
    %241 = vmatprep.subr.mxu0 %v99
    %242 = vmatpush1.msra.mxu0 %v98
    %243 = vmatprep.subr.mxu0 %v101
    %244 = vmatpush1.msra.mxu0 %v100
    %245 = vmatprep.subr.mxu0 %v103
    %246 = vmatpush1.msra.mxu0 %v102
    %247 = vmatprep.subr.mxu0 %v105
    %248 = vmatpush1.msra.mxu0 %v104
    %249 = vmatprep.subr.mxu0 %v107
    %250 = vmatpush1.msra.mxu0 %v106
    %251 = vmatprep.subr.mxu0 %v109
    %252 = vmatpush1.msra.mxu0 %v108
    %253 = vmatprep.subr.mxu0 %v111
    %254 = vmatpush1.msra.mxu0 %v110
    %255 = vmatprep.subr.mxu0 %v113
    %256 = vmatpush1.msra.mxu0 %v112
    %257 = vmatprep.subr.mxu0 %v115
    %258 = vmatpush1.msra.mxu0 %v114
    %259 = vmatprep.subr.mxu0 %v117
    %260 = vmatpush1.msra.mxu0 %v116
    %261 = vmatprep.subr.mxu0 %v119
    %262 = vmatpush1.msra.mxu0 %v118
    %263 = vmatprep.subr.mxu0 %v121
    %264 = vmatpush1.msra.mxu0 %v120
    %265 = vmatprep.subr.mxu0 %v123
    %266 = vmatpush1.msra.mxu0 %v122
    %267 = vmatprep.subr.mxu0 %v125
    %268 = vmatpush1.msra.mxu0 %v124
    %269 = vmatprep.subr.mxu0 %v127
    %270 = vmatpush1.msra.mxu0 %v126
    %271 = vmatprep.subr.mxu0 0.0
    %272 = vmatpush1.msra.mxu0 0.0
    %273 = vmatprep.subr.mxu0 0.0
    %274 = vmatpush1.msra.mxu0 0.0
    %275 = vmatprep.subr.mxu0 0.0
    %276 = vmatpush1.msra.mxu0 0.0
    %277 = vmatprep.subr.mxu0 0.0
    %278 = vmatpush1.msra.mxu0 0.0
    %279 = vmatprep.subr.mxu0 0.0
    %280 = vmatpush1.msra.mxu0 0.0
    %281 = vmatprep.subr.mxu0 0.0
    %282 = vmatpush1.msra.mxu0 0.0
    %283 = vmatprep.subr.mxu0 0.0
    %284 = vmatpush1.msra.mxu0 0.0
    %285 = vmatprep.subr.mxu0 0.0
    %286 = vmatpush1.msra.mxu0 0.0
    %287 = vmatprep.subr.mxu0 0.0
    %288 = vmatpush1.msra.mxu0 0.0
    %289 = vmatprep.subr.mxu0 0.0
    %290 = vmatpush1.msra.mxu0 0.0
    %291 = vmatprep.subr.mxu0 0.0
    %292 = vmatpush1.msra.mxu0 0.0
    %293 = vmatprep.subr.mxu0 0.0
    %294 = vmatpush1.msra.mxu0 0.0
    %295 = vmatprep.subr.mxu0 0.0
    %296 = vmatpush1.msra.mxu0 0.0
    %297 = vmatprep.subr.mxu0 0.0
    %298 = vmatpush1.msra.mxu0 0.0
    %299 = vmatprep.mubr.f32.mxu0 %v162
    %300 = vmatmul.mubr.f32.gmra.mrb[0].mxu0 %v155
    %v301 = vpop.f32.mrb[0].mxu0
    %v302 = vadd.f32 %v231, %v301
    %v303 = vpop.f32.mrb[0].mxu0
    %v304 = vadd.f32 %v233, %v303
    %305 = vdwg.mxu0
    %v306 = vmax.f32 %v302, 0.0
    %v307 = vmax.f32 %v304, 0.0
    %v308 = vld [vmem:[%s3] sm:$0xff]
    %v309 = vld [vmem:[%s3 + $0x8] sm:$0xff]
    %v310 = vld [vmem:[%s3 + $0x10] sm:$0xff]
    %v311 = vld [vmem:[%s3 + $0x18] sm:$0xff]
    %v312 = vld [vmem:[%s3 + $0x20] sm:$0xff]
    %v313 = vld [vmem:[%s3 + $0x28] sm:$0xff]
    %v314 = vld [vmem:[%s3 + $0x30] sm:$0xff]
    %v315 = vld [vmem:[%s3 + $0x38] sm:$0xff]
    %v316 = vld [vmem:[%s3 + $0x40] sm:$0xff]
    %v317 = vld [vmem:[%s3 + $0x48] sm:$0xff]
    %v318 = vld [vmem:[%s3 + $0x50] sm:$0xff]
    %v319 = vld [vmem:[%s3 + $0x58] sm:$0xff]
    %v320 = vld [vmem:[%s3 + $0x60] sm:$0xff]
    %v321 = vld [vmem:[%s3 + $0x68] sm:$0xff]
    %v322 = vld [vmem:[%s3 + $0x70] sm:$0xff]
    %v323 = vld [vmem:[%s3 + $0x78] sm:$0xff]
    %v324 = vld [vmem:[%s3 + $0x80] sm:$0xff]
    %v325 = vld [vmem:[%s3 + $0x88] sm:$0xff]
    %v326 = vld [vmem:[%s3 + $0x90] sm:$0xff]
    %v327 = vld [vmem:[%s3 + $0x98] sm:$0xff]
    %v328 = vld [vmem:[%s3 + $0xa0] sm:$0xff]
    %v329 = vld [vmem:[%s3 + $0xa8] sm:$0xff]
    %v330 = vld [vmem:[%s3 + $0xb0] sm:$0xff]
    %v331 = vld [vmem:[%s3 + $0xb8] sm:$0xff]
    %v332 = vld [vmem:[%s3 + $0xc0] sm:$0xff]
    %v333 = vld [vmem:[%s3 + $0xc8] sm:$0xff]
    %v334 = vld [vmem:[%s3 + $0xd0] sm:$0xff]
    %v335 = vld [vmem:[%s3 + $0xd8] sm:$0xff]
    %v336 = vld [vmem:[%s3 + $0xe0] sm:$0xff]
    %v337 = vld [vmem:[%s3 + $0xe8] sm:$0xff]
    %v338 = vld [vmem:[%s3 + $0xf0] sm:$0xff]
    %v339 = vld [vmem:[%s3 + $0xf8] sm:$0xff]
    %v340 = vld [vmem:[%s4] sm:$0x1]
    %v342 = vlaneseq
    %v343 = vshrl.u32 %v342, 7
    %v344 = vsub.s32 0, %v343
    %v345 = vrot.slane %v340, %v344
    %347 = vmatprep.subr.mxu0 0.0
    %348 = vmatpush1.msra.mxu0 %v308
    %349 = vmatprep.subr.mxu0 0.0
    %350 = vmatpush1.msra.mxu0 %v309
    %351 = vmatprep.subr.mxu0 0.0
    %352 = vmatpush1.msra.mxu0 %v310
    %353 = vmatprep.subr.mxu0 0.0
    %354 = vmatpush1.msra.mxu0 %v311
    %355 = vmatprep.subr.mxu0 0.0
    %356 = vmatpush1.msra.mxu0 %v312
    %357 = vmatprep.subr.mxu0 0.0
    %358 = vmatpush1.msra.mxu0 %v313
    %359 = vmatprep.subr.mxu0 0.0
    %360 = vmatpush1.msra.mxu0 %v314
    %361 = vmatprep.subr.mxu0 0.0
    %362 = vmatpush1.msra.mxu0 %v315
    %363 = vmatprep.subr.mxu0 0.0
    %364 = vmatpush1.msra.mxu0 %v316
    %365 = vmatprep.subr.mxu0 0.0
    %366 = vmatpush1.msra.mxu0 %v317
    %367 = vmatprep.subr.mxu0 0.0
    %368 = vmatpush1.msra.mxu0 %v318
    %369 = vmatprep.subr.mxu0 0.0
    %370 = vmatpush1.msra.mxu0 %v319
    %371 = vmatprep.subr.mxu0 0.0
    %372 = vmatpush1.msra.mxu0 %v320
    %373 = vmatprep.subr.mxu0 0.0
    %374 = vmatpush1.msra.mxu0 %v321
    %375 = vmatprep.subr.mxu0 0.0
    %376 = vmatpush1.msra.mxu0 %v322
    %377 = vmatprep.subr.mxu0 0.0
    %378 = vmatpush1.msra.mxu0 %v323
    %379 = vmatprep.subr.mxu0 0.0
    %380 = vmatpush1.msra.mxu0 %v324
    %381 = vmatprep.subr.mxu0 0.0
    %382 = vmatpush1.msra.mxu0 %v325
    %383 = vmatprep.subr.mxu0 0.0
    %384 = vmatpush1.msra.mxu0 %v326
    %385 = vmatprep.subr.mxu0 0.0
    %386 = vmatpush1.msra.mxu0 %v327
    %387 = vmatprep.subr.mxu0 0.0
    %388 = vmatpush1.msra.mxu0 %v328
    %389 = vmatprep.subr.mxu0 0.0
    %390 = vmatpush1.msra.mxu0 %v329
    %391 = vmatprep.subr.mxu0 0.0
    %392 = vmatpush1.msra.mxu0 %v330
    %393 = vmatprep.subr.mxu0 0.0
    %394 = vmatpush1.msra.mxu0 %v331
    %395 = vmatprep.subr.mxu0 0.0
    %396 = vmatpush1.msra.mxu0 %v332
    %397 = vmatprep.subr.mxu0 0.0
    %398 = vmatpush1.msra.mxu0 %v333
    %399 = vmatprep.subr.mxu0 0.0
    %400 = vmatpush1.msra.mxu0 %v334
    %401 = vmatprep.subr.mxu0 0.0
    %402 = vmatpush1.msra.mxu0 %v335
    %403 = vmatprep.subr.mxu0 0.0
    %404 = vmatpush1.msra.mxu0 %v336
    %405 = vmatprep.subr.mxu0 0.0
    %406 = vmatpush1.msra.mxu0 %v337
    %407 = vmatprep.subr.mxu0 0.0
    %408 = vmatpush1.msra.mxu0 %v338
    %409 = vmatprep.subr.mxu0 0.0
    %410 = vmatpush1.msra.mxu0 %v339
    %411 = vmatprep.mubr.f32.mxu0 %v307
    %412 = vmatmul.mubr.f32.gmra.mrb[0].mxu0 %v306
    %v413 = vpop.f32.mrb[0].mxu0
    %v414 = vadd.f32 %v345, %v413
    %v415 = vpop.f32.mrb[0].mxu0
    %416 = vdwg.mxu0
    %v417 = vmax.f32 %v414, 0.0
    %v418 = vld [vmem:[%s5] sm:$0xff]
    %v419 = vld [vmem:[%s5 + $0x8] sm:$0xff]
    %v420 = vld [vmem:[%s5 + $0x10] sm:$0xff]
    %v421 = vld [vmem:[%s5 + $0x18] sm:$0xff]
    %v422 = vld [vmem:[%s5 + $0x20] sm:$0xff]
    %v423 = vld [vmem:[%s5 + $0x28] sm:$0xff]
    %v424 = vld [vmem:[%s5 + $0x30] sm:$0xff]
    %v425 = vld [vmem:[%s5 + $0x38] sm:$0xff]
    %v426 = vld [vmem:[%s5 + $0x40] sm:$0xff]
    %v427 = vld [vmem:[%s5 + $0x48] sm:$0xff]
    %v428 = vld [vmem:[%s5 + $0x50] sm:$0xff]
    %v429 = vld [vmem:[%s5 + $0x58] sm:$0xff]
    %v430 = vld [vmem:[%s5 + $0x60] sm:$0xff]
    %v431 = vld [vmem:[%s5 + $0x68] sm:$0xff]
    %v432 = vld [vmem:[%s5 + $0x70] sm:$0xff]
    %v433 = vld [vmem:[%s5 + $0x78] sm:$0xff]
    %v434 = vld [vmem:[%s6] sm:$0x1]
    %v436 = vlaneseq
    %v437 = vshrl.u32 %v436, 7
    %v438 = vsub.s32 0, %v437
    %v439 = vrot.slane %v434, %v438
    %441 = vmatprep.subr.mxu0 0.0
    %442 = vmatpush1.msra.mxu0 %v418
    %443 = vmatprep.subr.mxu0 0.0
    %444 = vmatpush1.msra.mxu0 %v419
    %445 = vmatprep.subr.mxu0 0.0
    %446 = vmatpush1.msra.mxu0 %v420
    %447 = vmatprep.subr.mxu0 0.0
    %448 = vmatpush1.msra.mxu0 %v421
    %449 = vmatprep.subr.mxu0 0.0
    %450 = vmatpush1.msra.mxu0 %v422
    %451 = vmatprep.subr.mxu0 0.0
    %452 = vmatpush1.msra.mxu0 %v423
    %453 = vmatprep.subr.mxu0 0.0
    %454 = vmatpush1.msra.mxu0 %v424
    %455 = vmatprep.subr.mxu0 0.0
    %456 = vmatpush1.msra.mxu0 %v425
    %457 = vmatprep.subr.mxu0 0.0
    %458 = vmatpush1.msra.mxu0 %v426
    %459 = vmatprep.subr.mxu0 0.0
    %460 = vmatpush1.msra.mxu0 %v427
    %461 = vmatprep.subr.mxu0 0.0
    %462 = vmatpush1.msra.mxu0 %v428
    %463 = vmatprep.subr.mxu0 0.0
    %464 = vmatpush1.msra.mxu0 %v429
    %465 = vmatprep.subr.mxu0 0.0
    %466 = vmatpush1.msra.mxu0 %v430
    %467 = vmatprep.subr.mxu0 0.0
    %468 = vmatpush1.msra.mxu0 %v431
    %469 = vmatprep.subr.mxu0 0.0
    %470 = vmatpush1.msra.mxu0 %v432
    %471 = vmatprep.subr.mxu0 0.0
    %472 = vmatpush1.msra.mxu0 %v433
    %473 = vmatprep.subr.mxu0 0.0
    %474 = vmatpush1.msra.mxu0 0.0
    %475 = vmatprep.subr.mxu0 0.0
    %476 = vmatpush1.msra.mxu0 0.0
    %477 = vmatprep.subr.mxu0 0.0
    %478 = vmatpush1.msra.mxu0 0.0
    %479 = vmatprep.subr.mxu0 0.0
    %480 = vmatpush1.msra.mxu0 0.0
    %481 = vmatprep.subr.mxu0 0.0
    %482 = vmatpush1.msra.mxu0 0.0
    %483 = vmatprep.subr.mxu0 0.0
    %484 = vmatpush1.msra.mxu0 0.0
    %485 = vmatprep.subr.mxu0 0.0
    %486 = vmatpush1.msra.mxu0 0.0
    %487 = vmatprep.subr.mxu0 0.0
    %488 = vmatpush1.msra.mxu0 0.0
    %489 = vmatprep.subr.mxu0 0.0
    %490 = vmatpush1.msra.mxu0 0.0
    %491 = vmatprep.subr.mxu0 0.0
    %492 = vmatpush1.msra.mxu0 0.0
    %493 = vmatprep.subr.mxu0 0.0
    %494 = vmatpush1.msra.mxu0 0.0
    %495 = vmatprep.subr.mxu0 0.0
    %496 = vmatpush1.msra.mxu0 0.0
    %497 = vmatprep.subr.mxu0 0.0
    %498 = vmatpush1.msra.mxu0 0.0
    %499 = vmatprep.subr.mxu0 0.0
    %500 = vmatpush1.msra.mxu0 0.0
    %501 = vmatprep.subr.mxu0 0.0
    %502 = vmatpush1.msra.mxu0 0.0
    %503 = vmatprep.subr.mxu0 0.0
    %504 = vmatpush1.msra.mxu0 0.0
    %505 = vmatprep.mubr.f32.mxu0 0.0
    %506 = vmatmul.mubr.f32.gmra.mrb[0].mxu0 %v417
    %v507 = vpop.f32.mrb[0].mxu0
    %v508 = vadd.f32 %v439, %v507
    %v509 = vpop.f32.mrb[0].mxu0
    %510 = vdwg.mxu0
    %vm511 = vcmask 812032
    %512 = vst.msk [vmem:[#allocation2] sm:$0x3] %vm511, %v508
    // Predicated region
    $region30: #{_lenet_apply.5} parent=1 // pred_check
      _
    $region31: #{_lenet_apply.5} parent=1 // pred_check_branch
      %514 = sbr.rel (0) target = $region33
    $region32: #{_lenet_apply.5} parent=1 // pred_region
      %s516 = ssub.s32 32, 32
      %517 = vsyncadd [#allocation3], %s516
      %s519 = sshll.u32 [#allocation2], 4
      %s520 = int_to_ptr.vmem [resolvable:$true] %s519
      %522 = dma.vmem_to_hbm [thread:$0]  %s520, 32, %s7, [#allocation3]
    $region33: #{_lenet_apply.5} parent=1 // pred_fallthru
      _
    // Predicated region
    $region34: #{_lenet_apply.5} parent=1 // pred_check
      _
    $region35: #{_lenet_apply.5} parent=1 // pred_check_branch
      %524 = sbr.rel (0) target = $region37
    $region36: #{_lenet_apply.5} parent=1 // pred_region
      %525 = dma.done [#allocation3], 32
    $region37: #{_lenet_apply.5} parent=1 // pred_fallthru
      _
    %526 = vsyncpa [#allocation3], 1

</llo_original>
